<compile_context>
chip_gen: v7x
topology: tpu7x:2x2x1
jax: 0.10.0
libtpu: 0.0.40
codegen_flags: <defaults>
</compile_context>

<pallas_src>
import functools
import math

import jax
import jax.numpy as jnp
from jax.experimental import pallas as pl
from jax.experimental.pallas import tpu as pltpu


def _attention_pool_kernel(x_ref, pos_ref, posq_ref, wq_ref, bq_ref, wk_ref,
                           bk_ref, wv_ref, bv_ref, sel_ref, selt_ref, wc_ref,
                           bc_ref, out_ref, *, mm_dtype):
    """One grid step == bb batch elements.

    x_ref    : [bb, T, C]   activations, channels on the lane axis
    pos_ref  : [T1p, C]     pos-emb rows: [spatial..., mean, zero-pad], mm dtype
    posq_ref : [1, C]       pos-emb row of the mean token, f32
    wq/bq    : [C, C]/[1,C] query weight/bias (token-0 only), scale folded in
    wk/bk    : [C, C]/[1,C] key weight/bias, scale folded in
    wv/bv    : [C, C]/[1,C] value weight/bias
    sel_ref  : [C, H]       block-diagonal channel -> head selector (f32)
    selt_ref : [H, C]       head -> channel selector (f32)
    wc/bc    : [C, Dp]/[1,Dp] c_proj weight/bias, lane-padded to Dp (mult of 128)
    out_ref  : [bb, Dp]     pooled output, lane-dense 2-D block
    """
    BB, T, C = x_ref.shape
    T1 = T + 1
    T1p = pos_ref.shape[0]
    H = sel_ref.shape[1]

    # ---- tokens: [spatial ..., mean, zero-pad] in matmul dtype (mean in f32) ----
    x = x_ref[...]
    mean = jnp.mean(x.astype(jnp.float32), axis=1, keepdims=True)        # [bb,1,C] f32
    pieces = [x.astype(mm_dtype), mean.astype(mm_dtype)]
    if T1p > T1:
        pieces.append(jnp.zeros((BB, T1p - T1, C), mm_dtype))
    tok = jnp.concatenate(pieces, axis=1) + pos_ref[...][None, :, :]      # [bb,T1p,C]
    tok2d = tok.reshape(BB * T1p, C)

    # ---- query projection for the pooled (mean) token only ----
    q_in = (mean + posq_ref[...][None, :, :]).astype(mm_dtype)            # [bb,1,C]
    q0 = (jnp.dot(q_in.reshape(BB, C), wq_ref[...],
                  preferred_element_type=jnp.float32) + bq_ref[...])      # [bb,C] f32

    # ---- keys -> per-head scores -> softmax (before V is materialized) ----
    k = (jnp.dot(tok2d, wk_ref[...], preferred_element_type=jnp.float32)
         + bk_ref[...]).reshape(BB, T1p, C)                               # f32
    scores = jnp.dot((q0[:, None, :] * k).reshape(BB * T1p, C), sel_ref[...],
                     preferred_element_type=jnp.float32).reshape(BB, T1p, H)
    if T1p > T1:                                                          # mask pad rows
        row = jax.lax.broadcasted_iota(jnp.int32, scores.shape, 1)
        scores = jnp.where(row < T1, scores, -1e30)                       # f32 only
    m = jnp.max(scores, axis=1, keepdims=True)                            # [bb,1,H]
    e = jnp.exp(scores - m)
    s = jnp.sum(e, axis=1, keepdims=True)
    probs = e * pl.reciprocal(s, approx=True)                             # [bb,T1p,H]

    # ---- expand head probs to channels, apply to V, reduce over tokens ----
    pe = jnp.dot(probs.reshape(BB * T1p, H), selt_ref[...],
                 preferred_element_type=jnp.float32).reshape(BB, T1p, C)
    v = (jnp.dot(tok2d, wv_ref[...], preferred_element_type=jnp.float32)
         + bv_ref[...]).reshape(BB, T1p, C)
    a = jnp.sum(pe * v, axis=1)                                           # [bb,C] f32

    # ---- output projection (lane-dense Dp), dense 2-D store ----
    y = jnp.dot(a.astype(mm_dtype), wc_ref[...],
                preferred_element_type=jnp.float32) + bc_ref[...]         # [bb,Dp]
    out_ref[...] = y.astype(out_ref.dtype)


def attention_pool_2d(x, pos_emb, w_qkv, b_qkv, w_c, b_c, num_heads,
                      *, matmul_dtype=jnp.bfloat16, block_batch=None):
    """x: [B, C, H, W] (NCHW, like PyTorch). Returns [B, output_dim]."""
    B, C, Him, Wim = x.shape
    T = Him * Wim
    T1 = T + 1
    T1p = ((T1 + 7) // 8) * 8                 # sublane-aligned token count
    Dout = w_c.shape[0]
    Dp = ((Dout + 127) // 128) * 128          # lane-dense output width
    ch = C // num_heads
    scale = 1.0 / math.sqrt(math.sqrt(ch))
    mm_bytes = jnp.dtype(matmul_dtype).itemsize

    # ---- activation layout: one wrapper transpose so C is the lane axis ----
    xt = jnp.transpose(x.reshape(B, C, T), (0, 2, 1))                     # [B, T, C]

    # ---- parameter preprocessing (trace-time, tiny) ----
    pos_t = jnp.transpose(pos_emb).astype(jnp.float32)                    # [T1, C]
    pos_q = pos_t[0:1]                                                    # mean row (f32)
    pos_rows = jnp.concatenate([pos_t[1:], pos_q], axis=0)                # mean row last
    pos_rows = jnp.pad(pos_rows, ((0, T1p - T1), (0, 0))).astype(matmul_dtype)

    wq = (jnp.transpose(w_qkv[0 * C:1 * C, :, 0]) * scale).astype(matmul_dtype)
    wk = (jnp.transpose(w_qkv[1 * C:2 * C, :, 0]) * scale).astype(matmul_dtype)
    wv = jnp.transpose(w_qkv[2 * C:3 * C, :, 0]).astype(matmul_dtype)
    bq = (b_qkv[0 * C:1 * C] * scale).reshape(1, C).astype(jnp.float32)
    bk = (b_qkv[1 * C:2 * C] * scale).reshape(1, C).astype(jnp.float32)
    bv = b_qkv[2 * C:3 * C].reshape(1, C).astype(jnp.float32)

    wc = jnp.pad(jnp.transpose(w_c[:, :, 0]),
                 ((0, 0), (0, Dp - Dout))).astype(matmul_dtype)           # [C, Dp]
    bc = jnp.pad(b_c.reshape(1, Dout).astype(jnp.float32), ((0, 0), (0, Dp - Dout)))

    head_id = jnp.arange(C) // ch
    sel = (head_id[:, None] == jnp.arange(num_heads)[None, :]).astype(jnp.float32)
    selt = jnp.transpose(sel)                                             # [H, C]

    # ---- batch blocking from a VMEM budget (grid = 1 when it fits) ----
    def step_bytes(bb):
        x_blk = 2 * bb * T * C * 4             # double-buffered input block
        o_blk = 2 * bb * Dp * 4                # double-buffered output block
        live = bb * T1p * C * (mm_bytes + 12)  # tok(mm) + ~3 live f32 [T1p,C] tensors
        return x_blk + o_blk + live

    w_bytes = 2 * ((3 * C * C + C * Dp) * mm_bytes
                   + (T1p * C + 4 * C + Dp + 2 * C * num_heads) * 4)
    budget = max(8 * 2**20, 48 * 2**20 - w_bytes)   # headroom for v7x's 64 MiB/TC

    if block_batch is None:
        bb = 1
        for d in range(1, B + 1):
            if B % d == 0 and step_bytes(d) <= budget:
                bb = d
    else:
        bb = int(block_batch)
        if B % bb != 0:
            raise ValueError(f"block_batch {bb} must divide batch {B}")
    grid = (B // bb,)

    vmem_limit = int(min(100 * 2**20,
                         max(32 * 2**20, 1.5 * (w_bytes + step_bytes(bb)))))

    kernel = functools.partial(_attention_pool_kernel, mm_dtype=matmul_dtype)
    cp_cls = getattr(pltpu, "CompilerParams", None) or getattr(pltpu, "TPUCompilerParams")

    out = pl.pallas_call(
        kernel,
        out_shape=jax.ShapeDtypeStruct((B, Dp), x.dtype),
        grid=grid,
        in_specs=[
            pl.BlockSpec((bb, T, C), lambda b: (b, 0, 0)),        # x  [B, T, C]
            pl.BlockSpec((T1p, C), lambda b: (0, 0)),             # pos rows (mm)
            pl.BlockSpec((1, C), lambda b: (0, 0)),               # pos of mean row (f32)
            pl.BlockSpec((C, C), lambda b: (0, 0)),               # wq
            pl.BlockSpec((1, C), lambda b: (0, 0)),               # bq
            pl.BlockSpec((C, C), lambda b: (0, 0)),               # wk
            pl.BlockSpec((1, C), lambda b: (0, 0)),               # bk
            pl.BlockSpec((C, C), lambda b: (0, 0)),               # wv
            pl.BlockSpec((1, C), lambda b: (0, 0)),               # bv
            pl.BlockSpec((C, num_heads), lambda b: (0, 0)),       # sel
            pl.BlockSpec((num_heads, C), lambda b: (0, 0)),       # selt
            pl.BlockSpec((C, Dp), lambda b: (0, 0)),              # wc
            pl.BlockSpec((1, Dp), lambda b: (0, 0)),              # bc
        ],
        out_specs=pl.BlockSpec((bb, Dp), lambda b: (b, 0)),
        compiler_params=cp_cls(
            dimension_semantics=("parallel",),
            vmem_limit_bytes=vmem_limit,
        ),
    )(xt, pos_rows, pos_q, wq, bq, wk, bk, wv, bv, sel, selt, wc, bc)

    return out[:, :Dout]


def _reference(x, pos_emb, w_qkv, b_qkv, w_c, b_c, num_heads):
    """Pure-JAX transcription of the PyTorch forward, for verification."""
    B, C, Him, Wim = x.shape
    T = Him * Wim
    xt = x.reshape(B, C, T)
    xt = jnp.concatenate([xt.mean(axis=-1, keepdims=True), xt], axis=-1)
    xt = xt + pos_emb[None, :, :]
    qkv = jnp.einsum('oc,bct->bot', w_qkv[:, :, 0], xt) + b_qkv[None, :, None]
    ch = C // num_heads
    q, k, v = jnp.split(qkv, 3, axis=1)
    scale = 1.0 / math.sqrt(math.sqrt(ch))
    qh = (q * scale).reshape(B * num_heads, ch, T + 1)
    kh = (k * scale).reshape(B * num_heads, ch, T + 1)
    vh = v.reshape(B * num_heads, ch, T + 1)
    w = jnp.einsum('bct,bcs->bts', qh, kh)
    w = jax.nn.softmax(w, axis=-1)
    a = jnp.einsum('bts,bcs->bct', w, vh).reshape(B, C, T + 1)
    y = jnp.einsum('oc,bct->bot', w_c[:, :, 0], a) + b_c[None, :, None]
    return y[:, :, 0]


if __name__ == "__main__":
    # spacial_dim=4 (H=W=4, T=16 -> T1=17), embed_dim=32,
    # num_heads_channels=8 -> num_heads=4, output_dim=16, batch=4.
    B, C, Him, Wim = 4, 32, 4, 4
    num_heads_channels = 8
    output_dim = 16
    num_heads = C // num_heads_channels
    T1 = Him * Wim + 1

    key = jax.random.PRNGKey(0)
    kx, kpos, kwq, kbq, kwc, kbc = jax.random.split(key, 6)

    x = jax.random.normal(kx, (B, C, Him, Wim), dtype=jnp.float32)
    pos_emb = jax.random.normal(kpos, (C, T1), dtype=jnp.float32) / (C ** 0.5)
    w_qkv = jax.random.normal(kwq, (3 * C, C, 1), dtype=jnp.float32) * 0.05
    b_qkv = jax.random.normal(kbq, (3 * C,), dtype=jnp.float32) * 0.05
    w_c = jax.random.normal(kwc, (output_dim, C, 1), dtype=jnp.float32) * 0.05
    b_c = jax.random.normal(kbc, (output_dim,), dtype=jnp.float32) * 0.05

    ref = _reference(x, pos_emb, w_qkv, b_qkv, w_c, b_c, num_heads)

    # f32 matmul path (tighter check; only approx-reciprocal error).
    out_f32 = attention_pool_2d(x, pos_emb, w_qkv, b_qkv, w_c, b_c, num_heads,
                                matmul_dtype=jnp.float32)
    out_f32 = jax.block_until_ready(out_f32)
    assert out_f32.shape == (B, output_dim)
    err_f32 = jnp.max(jnp.abs(out_f32 - ref))
    assert jnp.allclose(out_f32, ref, atol=1e-2, rtol=1e-2), (
        f"f32 path max abs err {err_f32}")

    # bf16 matmul path (the optimized default): relaxed tolerance.
    out_bf16 = attention_pool_2d(x, pos_emb, w_qkv, b_qkv, w_c, b_c, num_heads,
                                 matmul_dtype=jnp.bfloat16)
    out_bf16 = jax.block_until_ready(out_bf16)
    assert out_bf16.shape == (B, output_dim)
    err_bf16 = jnp.max(jnp.abs(out_bf16 - ref))
    assert jnp.allclose(out_bf16, ref, atol=1e-1, rtol=1e-1), (
        f"bf16 path max abs err {err_bf16}")

    print("KERNEL_OK")
</pallas_src>

<mosaic_0001>
module attributes {stable_mosaic.version = 11 : i64} {
  func.func @_attention_pool_kernel(%arg0: i32, %arg1: memref<4x16x32xf32, #tpu.memory_space<vmem>>, %arg2: memref<24x32xf32, #tpu.memory_space<vmem>>, %arg3: memref<1x32xf32, #tpu.memory_space<vmem>>, %arg4: memref<32x32xf32, #tpu.memory_space<vmem>>, %arg5: memref<1x32xf32, #tpu.memory_space<vmem>>, %arg6: memref<32x32xf32, #tpu.memory_space<vmem>>, %arg7: memref<1x32xf32, #tpu.memory_space<vmem>>, %arg8: memref<32x32xf32, #tpu.memory_space<vmem>>, %arg9: memref<1x32xf32, #tpu.memory_space<vmem>>, %arg10: memref<32x4xf32, #tpu.memory_space<vmem>>, %arg11: memref<4x32xf32, #tpu.memory_space<vmem>>, %arg12: memref<32x128xf32, #tpu.memory_space<vmem>>, %arg13: memref<1x128xf32, #tpu.memory_space<vmem>>, %arg14: memref<4x128xf32, #tpu.memory_space<vmem>>) attributes {dimension_semantics = [#tpu.dimension_semantics<parallel>], iteration_bounds = array<i64: 1>, scalar_prefetch = 0 : i64, scratch_operands = 0 : i64, tpu.core_type = #tpu.core_type<tc>, window_params = [{transform_indices = @transform_0, window_bounds = array<i64: 4, 16, 32>}, {pipeline_mode = #tpu.pipeline_mode<synchronous>, transform_indices = @transform_1, window_bounds = array<i64: 24, 32>}, {pipeline_mode = #tpu.pipeline_mode<synchronous>, transform_indices = @transform_2, window_bounds = array<i64: 1, 32>}, {pipeline_mode = #tpu.pipeline_mode<synchronous>, transform_indices = @transform_3, window_bounds = array<i64: 32, 32>}, {pipeline_mode = #tpu.pipeline_mode<synchronous>, transform_indices = @transform_4, window_bounds = array<i64: 1, 32>}, {pipeline_mode = #tpu.pipeline_mode<synchronous>, transform_indices = @transform_5, window_bounds = array<i64: 32, 32>}, {pipeline_mode = #tpu.pipeline_mode<synchronous>, transform_indices = @transform_6, window_bounds = array<i64: 1, 32>}, {pipeline_mode = #tpu.pipeline_mode<synchronous>, transform_indices = @transform_7, window_bounds = array<i64: 32, 32>}, {pipeline_mode = #tpu.pipeline_mode<synchronous>, transform_indices = @transform_8, window_bounds = array<i64: 1, 32>}, {pipeline_mode = #tpu.pipeline_mode<synchronous>, transform_indices = @transform_9, window_bounds = array<i64: 32, 4>}, {pipeline_mode = #tpu.pipeline_mode<synchronous>, transform_indices = @transform_10, window_bounds = array<i64: 4, 32>}, {pipeline_mode = #tpu.pipeline_mode<synchronous>, transform_indices = @transform_11, window_bounds = array<i64: 32, 128>}, {pipeline_mode = #tpu.pipeline_mode<synchronous>, transform_indices = @transform_12, window_bounds = array<i64: 1, 128>}, {transform_indices = @transform_13, window_bounds = array<i64: 4, 128>}]} {
    %c0 = arith.constant 0 : index
    %c0_0 = arith.constant 0 : index
    %c0_1 = arith.constant 0 : index
    %0 = vector.load %arg1[%c0, %c0_0, %c0_1] : memref<4x16x32xf32, #tpu.memory_space<vmem>>, vector<4x16x32xf32>
    %cst = arith.constant dense<0.000000e+00> : vector<4x32xf32>
    %1 = vector.multi_reduction <add>, %0, %cst [1] : vector<4x16x32xf32> to vector<4x32xf32>
    %2 = vector.shape_cast %1 : vector<4x32xf32> to vector<4x1x32xf32>
    %cst_2 = arith.constant 1.600000e+01 : f32
    %3 = vector.broadcast %cst_2 : f32 to vector<4x1x32xf32>
    %4 = arith.divf %2, %3 : vector<4x1x32xf32>
    %cst_3 = arith.constant 0.000000e+00 : f32
    %5 = vector.broadcast %cst_3 : f32 to vector<4x7x32xf32>
    %6 = tpu.concatenate %0, %4, %5 in 1 : vector<4x16x32xf32>, vector<4x1x32xf32>, vector<4x7x32xf32> -> vector<4x24x32xf32>
    %c0_4 = arith.constant 0 : index
    %c0_5 = arith.constant 0 : index
    %7 = vector.load %arg2[%c0_4, %c0_5] : memref<24x32xf32, #tpu.memory_space<vmem>>, vector<24x32xf32>
    %8 = vector.shape_cast %7 : vector<24x32xf32> to vector<1x24x32xf32>
    %9 = vector.broadcast %8 : vector<1x24x32xf32> to vector<4x24x32xf32>
    %10 = arith.addf %6, %9 : vector<4x24x32xf32>
    %11 = vector.shape_cast %10 : vector<4x24x32xf32> to vector<96x32xf32>
    %c0_6 = arith.constant 0 : index
    %c0_7 = arith.constant 0 : index
    %12 = vector.load %arg3[%c0_6, %c0_7] : memref<1x32xf32, #tpu.memory_space<vmem>>, vector<1x32xf32>
    %13 = vector.shape_cast %12 : vector<1x32xf32> to vector<1x1x32xf32>
    %14 = vector.broadcast %13 : vector<1x1x32xf32> to vector<4x1x32xf32>
    %15 = arith.addf %4, %14 : vector<4x1x32xf32>
    %16 = vector.shape_cast %15 : vector<4x1x32xf32> to vector<4x32xf32>
    %c0_8 = arith.constant 0 : index
    %c0_9 = arith.constant 0 : index
    %17 = vector.load %arg4[%c0_8, %c0_9] : memref<32x32xf32, #tpu.memory_space<vmem>>, vector<32x32xf32>
    %cst_10 = arith.constant dense<0.000000e+00> : vector<4x32xf32>
    %18 = tpu.matmul %16, %17, %cst_10 {dimension_numbers = #tpu.dot_dimension_numbers<[1], [0], [0], [1], [0, 0, 1, 1], [], []>} : vector<4x32xf32>, vector<32x32xf32>, vector<4x32xf32> -> vector<4x32xf32>
    %c0_11 = arith.constant 0 : index
    %c0_12 = arith.constant 0 : index
    %19 = vector.load %arg5[%c0_11, %c0_12] : memref<1x32xf32, #tpu.memory_space<vmem>>, vector<1x32xf32>
    %20 = vector.broadcast %19 : vector<1x32xf32> to vector<4x32xf32>
    %21 = arith.addf %18, %20 : vector<4x32xf32>
    %c0_13 = arith.constant 0 : index
    %c0_14 = arith.constant 0 : index
    %22 = vector.load %arg6[%c0_13, %c0_14] : memref<32x32xf32, #tpu.memory_space<vmem>>, vector<32x32xf32>
    %cst_15 = arith.constant dense<0.000000e+00> : vector<96x32xf32>
    %23 = tpu.matmul %11, %22, %cst_15 {dimension_numbers = #tpu.dot_dimension_numbers<[1], [0], [0], [1], [0, 0, 1, 1], [], []>} : vector<96x32xf32>, vector<32x32xf32>, vector<96x32xf32> -> vector<96x32xf32>
    %c0_16 = arith.constant 0 : index
    %c0_17 = arith.constant 0 : index
    %24 = vector.load %arg7[%c0_16, %c0_17] : memref<1x32xf32, #tpu.memory_space<vmem>>, vector<1x32xf32>
    %25 = vector.broadcast %24 : vector<1x32xf32> to vector<96x32xf32>
    %26 = arith.addf %23, %25 : vector<96x32xf32>
    %27 = vector.shape_cast %26 : vector<96x32xf32> to vector<4x24x32xf32>
    %28 = vector.shape_cast %21 : vector<4x32xf32> to vector<4x1x32xf32>
    %29 = vector.broadcast %28 : vector<4x1x32xf32> to vector<4x24x32xf32>
    %30 = arith.mulf %29, %27 : vector<4x24x32xf32>
    %31 = vector.shape_cast %30 : vector<4x24x32xf32> to vector<96x32xf32>
    %c0_18 = arith.constant 0 : index
    %c0_19 = arith.constant 0 : index
    %32 = vector.load %arg10[%c0_18, %c0_19] : memref<32x4xf32, #tpu.memory_space<vmem>>, vector<32x4xf32>
    %cst_20 = arith.constant dense<0.000000e+00> : vector<96x4xf32>
    %33 = tpu.matmul %31, %32, %cst_20 {dimension_numbers = #tpu.dot_dimension_numbers<[1], [0], [0], [1], [0, 0, 1, 1], [], []>} : vector<96x32xf32>, vector<32x4xf32>, vector<96x4xf32> -> vector<96x4xf32>
    %34 = vector.shape_cast %33 : vector<96x4xf32> to vector<4x24x4xf32>
    %35 = tpu.iota {dimensions = array<i32: 1>} : vector<4x24x4xi32>
    %c17_i32 = arith.constant 17 : i32
    %36 = vector.broadcast %c17_i32 : i32 to vector<4x24x4xi32>
    %37 = arith.cmpi slt, %35, %36 : vector<4x24x4xi32>
    %cst_21 = arith.constant -1.000000e+30 : f32
    %38 = vector.broadcast %cst_21 : f32 to vector<4x24x4xf32>
    %39 = arith.select %37, %34, %38 : vector<4x24x4xi1>, vector<4x24x4xf32>
    %cst_22 = arith.constant dense<0xFF800000> : vector<4x4xf32>
    %40 = vector.multi_reduction <maximumf>, %39, %cst_22 [1] : vector<4x24x4xf32> to vector<4x4xf32>
    %41 = vector.shape_cast %40 : vector<4x4xf32> to vector<4x1x4xf32>
    %42 = vector.broadcast %41 : vector<4x1x4xf32> to vector<4x24x4xf32>
    %43 = arith.subf %39, %42 : vector<4x24x4xf32>
    %44 = math.exp %43 : vector<4x24x4xf32>
    %cst_23 = arith.constant dense<0.000000e+00> : vector<4x4xf32>
    %45 = vector.multi_reduction <add>, %44, %cst_23 [1] : vector<4x24x4xf32> to vector<4x4xf32>
    %46 = vector.shape_cast %45 : vector<4x4xf32> to vector<4x1x4xf32>
    %47 = tpu.reciprocal %46 {approx = true} : vector<4x1x4xf32> -> vector<4x1x4xf32>
    %48 = vector.broadcast %47 : vector<4x1x4xf32> to vector<4x24x4xf32>
    %49 = arith.mulf %44, %48 : vector<4x24x4xf32>
    %50 = vector.shape_cast %49 : vector<4x24x4xf32> to vector<96x4xf32>
    %c0_24 = arith.constant 0 : index
    %c0_25 = arith.constant 0 : index
    %51 = vector.load %arg11[%c0_24, %c0_25] : memref<4x32xf32, #tpu.memory_space<vmem>>, vector<4x32xf32>
    %cst_26 = arith.constant dense<0.000000e+00> : vector<96x32xf32>
    %52 = tpu.matmul %50, %51, %cst_26 {dimension_numbers = #tpu.dot_dimension_numbers<[1], [0], [0], [1], [0, 0, 1, 1], [], []>} : vector<96x4xf32>, vector<4x32xf32>, vector<96x32xf32> -> vector<96x32xf32>
    %53 = vector.shape_cast %52 : vector<96x32xf32> to vector<4x24x32xf32>
    %c0_27 = arith.constant 0 : index
    %c0_28 = arith.constant 0 : index
    %54 = vector.load %arg8[%c0_27, %c0_28] : memref<32x32xf32, #tpu.memory_space<vmem>>, vector<32x32xf32>
    %cst_29 = arith.constant dense<0.000000e+00> : vector<96x32xf32>
    %55 = tpu.matmul %11, %54, %cst_29 {dimension_numbers = #tpu.dot_dimension_numbers<[1], [0], [0], [1], [0, 0, 1, 1], [], []>} : vector<96x32xf32>, vector<32x32xf32>, vector<96x32xf32> -> vector<96x32xf32>
    %c0_30 = arith.constant 0 : index
    %c0_31 = arith.constant 0 : index
    %56 = vector.load %arg9[%c0_30, %c0_31] : memref<1x32xf32, #tpu.memory_space<vmem>>, vector<1x32xf32>
    %57 = vector.broadcast %56 : vector<1x32xf32> to vector<96x32xf32>
    %58 = arith.addf %55, %57 : vector<96x32xf32>
    %59 = vector.shape_cast %58 : vector<96x32xf32> to vector<4x24x32xf32>
    %60 = arith.mulf %53, %59 : vector<4x24x32xf32>
    %cst_32 = arith.constant dense<0.000000e+00> : vector<4x32xf32>
    %61 = vector.multi_reduction <add>, %60, %cst_32 [1] : vector<4x24x32xf32> to vector<4x32xf32>
    %c0_33 = arith.constant 0 : index
    %c0_34 = arith.constant 0 : index
    %62 = vector.load %arg12[%c0_33, %c0_34] : memref<32x128xf32, #tpu.memory_space<vmem>>, vector<32x128xf32>
    %cst_35 = arith.constant dense<0.000000e+00> : vector<4x128xf32>
    %63 = tpu.matmul %61, %62, %cst_35 {dimension_numbers = #tpu.dot_dimension_numbers<[1], [0], [0], [1], [0, 0, 1, 1], [], []>} : vector<4x32xf32>, vector<32x128xf32>, vector<4x128xf32> -> vector<4x128xf32>
    %c0_36 = arith.constant 0 : index
    %c0_37 = arith.constant 0 : index
    %64 = vector.load %arg13[%c0_36, %c0_37] : memref<1x128xf32, #tpu.memory_space<vmem>>, vector<1x128xf32>
    %65 = vector.broadcast %64 : vector<1x128xf32> to vector<4x128xf32>
    %66 = arith.addf %63, %65 : vector<4x128xf32>
    %c0_38 = arith.constant 0 : index
    %c0_39 = arith.constant 0 : index
    %67 = vector.load %arg14[%c0_38, %c0_39] : memref<4x128xf32, #tpu.memory_space<vmem>>, vector<4x128xf32>
    tpu.vector_store %arg14[%c0_38, %c0_39], %66 {strides = array<i32>} : memref<4x128xf32, #tpu.memory_space<vmem>>, vector<4x128xf32>,
    return
  }
  func.func @transform_0(%arg0: i32) -> (i32, i32, i32) {
    %c0_i32 = arith.constant 0 : i32
    %c0_i32_0 = arith.constant 0 : i32
    %c0_i32_1 = arith.constant 0 : i32
    return %arg0, %c0_i32, %c0_i32_0 : i32, i32, i32
  }
  func.func @transform_1(%arg0: i32) -> (i32, i32) {
    %c0_i32 = arith.constant 0 : i32
    %c0_i32_0 = arith.constant 0 : i32
    %c0_i32_1 = arith.constant 0 : i32
    return %c0_i32, %c0_i32_0 : i32, i32
  }
  func.func @transform_2(%arg0: i32) -> (i32, i32) {
    %c0_i32 = arith.constant 0 : i32
    %c0_i32_0 = arith.constant 0 : i32
    %c0_i32_1 = arith.constant 0 : i32
    return %c0_i32, %c0_i32_0 : i32, i32
  }
  func.func @transform_3(%arg0: i32) -> (i32, i32) {
    %c0_i32 = arith.constant 0 : i32
    %c0_i32_0 = arith.constant 0 : i32
    %c0_i32_1 = arith.constant 0 : i32
    return %c0_i32, %c0_i32_0 : i32, i32
  }
  func.func @transform_4(%arg0: i32) -> (i32, i32) {
    %c0_i32 = arith.constant 0 : i32
    %c0_i32_0 = arith.constant 0 : i32
    %c0_i32_1 = arith.constant 0 : i32
    return %c0_i32, %c0_i32_0 : i32, i32
  }
  func.func @transform_5(%arg0: i32) -> (i32, i32) {
    %c0_i32 = arith.constant 0 : i32
    %c0_i32_0 = arith.constant 0 : i32
    %c0_i32_1 = arith.constant 0 : i32
    return %c0_i32, %c0_i32_0 : i32, i32
  }
  func.func @transform_6(%arg0: i32) -> (i32, i32) {
    %c0_i32 = arith.constant 0 : i32
    %c0_i32_0 = arith.constant 0 : i32
    %c0_i32_1 = arith.constant 0 : i32
    return %c0_i32, %c0_i32_0 : i32, i32
  }
  func.func @transform_7(%arg0: i32) -> (i32, i32) {
    %c0_i32 = arith.constant 0 : i32
    %c0_i32_0 = arith.constant 0 : i32
    %c0_i32_1 = arith.constant 0 : i32
    return %c0_i32, %c0_i32_0 : i32, i32
  }
  func.func @transform_8(%arg0: i32) -> (i32, i32) {
    %c0_i32 = arith.constant 0 : i32
    %c0_i32_0 = arith.constant 0 : i32
    %c0_i32_1 = arith.constant 0 : i32
    return %c0_i32, %c0_i32_0 : i32, i32
  }
  func.func @transform_9(%arg0: i32) -> (i32, i32) {
    %c0_i32 = arith.constant 0 : i32
    %c0_i32_0 = arith.constant 0 : i32
    %c0_i32_1 = arith.constant 0 : i32
    return %c0_i32, %c0_i32_0 : i32, i32
  }
  func.func @transform_10(%arg0: i32) -> (i32, i32) {
    %c0_i32 = arith.constant 0 : i32
    %c0_i32_0 = arith.constant 0 : i32
    %c0_i32_1 = arith.constant 0 : i32
    return %c0_i32, %c0_i32_0 : i32, i32
  }
  func.func @transform_11(%arg0: i32) -> (i32, i32) {
    %c0_i32 = arith.constant 0 : i32
    %c0_i32_0 = arith.constant 0 : i32
    %c0_i32_1 = arith.constant 0 : i32
    return %c0_i32, %c0_i32_0 : i32, i32
  }
  func.func @transform_12(%arg0: i32) -> (i32, i32) {
    %c0_i32 = arith.constant 0 : i32
    %c0_i32_0 = arith.constant 0 : i32
    %c0_i32_1 = arith.constant 0 : i32
    return %c0_i32, %c0_i32_0 : i32, i32
  }
  func.func @transform_13(%arg0: i32) -> (i32, i32) {
    %c0_i32 = arith.constant 0 : i32
    %c0_i32_0 = arith.constant 0 : i32
    return %arg0, %c0_i32 : i32, i32
  }
}

</mosaic_0001>

<llo_original>
// kernel: tpu_custom_call.1
$region0: #{tpu_custom_call.1}
  #allocation0 [shape = 'u32[]', space=smem, size = 0x4, offset = 0x4, fixed_abs, tag = 'smem constant byte address 0x4 - core index']
  #allocation1 [shape = 'u32[144,128]{1,0:T(1,128)}', space=vmem, size = 0x12000, scoped, tag = 'internal scratch']
  %s0 = inlined_call_operand.hbm [shape: f32[4,16,32], index: 0, kind: input, shape index: {}]
  %s1 = inlined_call_operand.hbm [shape: f32[24,32], index: 1, kind: input, shape index: {}]
  %s2 = inlined_call_operand.vmem [shape: f32[1,32], index: 2, kind: input, shape index: {}]
  %s3 = inlined_call_operand.vmem [shape: f32[32,32], index: 3, kind: input, shape index: {}]
  %s4 = inlined_call_operand.vmem [shape: f32[1,32], index: 4, kind: input, shape index: {}]
  %s5 = inlined_call_operand.hbm [shape: f32[32,32], index: 5, kind: input, shape index: {}]
  %s6 = inlined_call_operand.hbm [shape: f32[1,32], index: 6, kind: input, shape index: {}]
  %s7 = inlined_call_operand.hbm [shape: f32[32,32], index: 7, kind: input, shape index: {}]
  %s8 = inlined_call_operand.hbm [shape: f32[1,32], index: 8, kind: input, shape index: {}]
  %s9 = inlined_call_operand.vmem [shape: f32[32,4], index: 9, kind: input, shape index: {}]
  %s10 = inlined_call_operand.vmem [shape: f32[4,32], index: 10, kind: input, shape index: {}]
  %s11 = inlined_call_operand.vmem [shape: f32[32,128], index: 11, kind: input, shape index: {}]
  %s12 = inlined_call_operand.vmem [shape: f32[1,128], index: 12, kind: input, shape index: {}]
  %s13 = inlined_call_operand.hbm [shape: f32[4,128], index: 13, kind: output, shape index: {}]
  %s14 = sld [smem:[#allocation0]]
  $region86: #{tpu_custom_call.1} parent=0
    _
  %s16 = ssub.s32 1, %s14
  %s17 = scalar_select 0, %s16, %s14
  $region1: #{tpu_custom_call.1} parent=0
    #allocation2 [shape = 'u8[32768]{0}', space=vmem, size = 0x8000, scoped, tag = 'input window, operand 0, single buffered']
    #allocation3 [shape = 's32[1]{0}', space=sflag, size = 0x4, scoped, tag = 'scoped memory for tpu_custom_call.1']
    #allocation4 [shape = 's32[1]{0}', space=sflag, size = 0x4, scoped, tag = 'scoped memory for tpu_custom_call.1']
    #allocation5 [shape = 'u8[12288]{0}', space=vmem, size = 0x3000, scoped, tag = 'input window, operand 1, single buffered']
    #allocation6 [shape = 's32[1]{0}', space=sflag, size = 0x4, scoped, tag = 'scoped memory for tpu_custom_call.1']
    #allocation7 [shape = 'u8[16384]{0}', space=vmem, size = 0x4000, scoped, tag = 'input window, operand 5, single buffered']
    #allocation8 [shape = 'u8[512]{0}', space=vmem, size = 0x400, scoped, tag = 'input window, operand 6, single buffered']
    #allocation9 [shape = 's32[1]{0}', space=sflag, size = 0x4, scoped, tag = 'scoped memory for tpu_custom_call.1']
    #allocation10 [shape = 'u8[16384]{0}', space=vmem, size = 0x4000, scoped, tag = 'input window, operand 7, single buffered']
    #allocation11 [shape = 'u8[512]{0}', space=vmem, size = 0x400, scoped, tag = 'input window, operand 8, single buffered']
    #allocation12 [shape = 's32[1]{0}', space=sflag, size = 0x4, scoped, tag = 'scoped memory for tpu_custom_call.1']
    #allocation13 [shape = 'u8[2048]{0}', space=vmem, size = 0x800, scoped, tag = 'output window, operand 0, single buffered']
    %18 = vsyncpa [#allocation3], 0
    %19 = vsyncpa [#allocation6], 0
    %20 = vsyncpa [#allocation9], 0
    %21 = vsyncpa [#allocation12], 0
    %22 = vsyncpa [#allocation4], 0
    // Predicated region
    $region2: #{tpu_custom_call.1} parent=1 // pred_check
      _
    $region3: #{tpu_custom_call.1} parent=1 // pred_check_branch
      %24 = sbr.rel (0) target = $region5
    $region4: #{tpu_custom_call.1} parent=1 // pred_region
      %s26 = ssub.s32 1024, 1024
      %27 = vsyncadd [#allocation3], %s26
      %s28 = sshll.u32 [#allocation2], 4
      %s29 = int_to_ptr.vmem [resolvable:$true] %s28
      %34 = dma.hbm_to_vmem [thread:$0]  %s0, 1024, %s29, [#allocation3], 128, 128, 8
    $region5: #{tpu_custom_call.1} parent=1 // pred_fallthru
      _
    // Predicated region
    $region6: #{tpu_custom_call.1} parent=1 // pred_check
      _
    $region7: #{tpu_custom_call.1} parent=1 // pred_check_branch
      %36 = sbr.rel (0) target = $region9
    $region8: #{tpu_custom_call.1} parent=1 // pred_region
      %s38 = ssub.s32 384, 384
      %39 = vsyncadd [#allocation6], %s38
      %s40 = sshll.u32 [#allocation5], 4
      %s41 = int_to_ptr.vmem [resolvable:$true] %s40
      %46 = dma.hbm_to_vmem [thread:$0]  %s1, 384, %s41, [#allocation6], 128, 128, 8
    $region9: #{tpu_custom_call.1} parent=1 // pred_fallthru
      _
    // Predicated region
    $region10: #{tpu_custom_call.1} parent=1 // pred_check
      _
    $region11: #{tpu_custom_call.1} parent=1 // pred_check_branch
      %48 = sbr.rel (0) target = $region13
    $region12: #{tpu_custom_call.1} parent=1 // pred_region
      _
    $region13: #{tpu_custom_call.1} parent=1 // pred_fallthru
      _
    // Predicated region
    $region14: #{tpu_custom_call.1} parent=1 // pred_check
      _
    $region15: #{tpu_custom_call.1} parent=1 // pred_check_branch
      %50 = sbr.rel (0) target = $region17
    $region16: #{tpu_custom_call.1} parent=1 // pred_region
      _
    $region17: #{tpu_custom_call.1} parent=1 // pred_fallthru
      _
    // Predicated region
    $region18: #{tpu_custom_call.1} parent=1 // pred_check
      _
    $region19: #{tpu_custom_call.1} parent=1 // pred_check_branch
      %52 = sbr.rel (0) target = $region21
    $region20: #{tpu_custom_call.1} parent=1 // pred_region
      _
    $region21: #{tpu_custom_call.1} parent=1 // pred_fallthru
      _
    // Predicated region
    $region22: #{tpu_custom_call.1} parent=1 // pred_check
      _
    $region23: #{tpu_custom_call.1} parent=1 // pred_check_branch
      %54 = sbr.rel (0) target = $region25
    $region24: #{tpu_custom_call.1} parent=1 // pred_region
      %s56 = ssub.s32 512, 512
      %57 = vsyncadd [#allocation6], %s56
      %s58 = sshll.u32 [#allocation7], 4
      %s59 = int_to_ptr.vmem [resolvable:$true] %s58
      %64 = dma.hbm_to_vmem [thread:$0]  %s5, 512, %s59, [#allocation6], 128, 128, 8
    $region25: #{tpu_custom_call.1} parent=1 // pred_fallthru
      _
    // Predicated region
    $region26: #{tpu_custom_call.1} parent=1 // pred_check
      _
    $region27: #{tpu_custom_call.1} parent=1 // pred_check_branch
      %66 = sbr.rel (0) target = $region29
    $region28: #{tpu_custom_call.1} parent=1 // pred_region
      %s68 = ssub.s32 16, 16
      %69 = vsyncadd [#allocation9], %s68
      %s71 = sshll.u32 [#allocation8], 4
      %s72 = int_to_ptr.vmem [resolvable:$true] %s71
      %74 = dma.hbm_to_vmem [thread:$0]  %s6, 16, %s72, [#allocation9]
    $region29: #{tpu_custom_call.1} parent=1 // pred_fallthru
      _
    // Predicated region
    $region30: #{tpu_custom_call.1} parent=1 // pred_check
      _
    $region31: #{tpu_custom_call.1} parent=1 // pred_check_branch
      %76 = sbr.rel (0) target = $region33
    $region32: #{tpu_custom_call.1} parent=1 // pred_region
      %s78 = ssub.s32 512, 512
      %79 = vsyncadd [#allocation9], %s78
      %s80 = sshll.u32 [#allocation10], 4
      %s81 = int_to_ptr.vmem [resolvable:$true] %s80
      %86 = dma.hbm_to_vmem [thread:$0]  %s7, 512, %s81, [#allocation9], 128, 128, 8
    $region33: #{tpu_custom_call.1} parent=1 // pred_fallthru
      _
    // Predicated region
    $region34: #{tpu_custom_call.1} parent=1 // pred_check
      _
    $region35: #{tpu_custom_call.1} parent=1 // pred_check_branch
      %88 = sbr.rel (0) target = $region37
    $region36: #{tpu_custom_call.1} parent=1 // pred_region
      %s90 = ssub.s32 16, 16
      %91 = vsyncadd [#allocation12], %s90
      %s93 = sshll.u32 [#allocation11], 4
      %s94 = int_to_ptr.vmem [resolvable:$true] %s93
      %96 = dma.hbm_to_vmem [thread:$0]  %s8, 16, %s94, [#allocation12]
    $region37: #{tpu_custom_call.1} parent=1 // pred_fallthru
      _
    // Predicated region
    $region38: #{tpu_custom_call.1} parent=1 // pred_check
      _
    $region39: #{tpu_custom_call.1} parent=1 // pred_check_branch
      %98 = sbr.rel (0) target = $region41
    $region40: #{tpu_custom_call.1} parent=1 // pred_region
      _
    $region41: #{tpu_custom_call.1} parent=1 // pred_fallthru
      _
    // Predicated region
    $region42: #{tpu_custom_call.1} parent=1 // pred_check
      _
    $region43: #{tpu_custom_call.1} parent=1 // pred_check_branch
      %100 = sbr.rel (0) target = $region45
    $region44: #{tpu_custom_call.1} parent=1 // pred_region
      _
    $region45: #{tpu_custom_call.1} parent=1 // pred_fallthru
      _
    // Predicated region
    $region46: #{tpu_custom_call.1} parent=1 // pred_check
      _
    $region47: #{tpu_custom_call.1} parent=1 // pred_check_branch
      %102 = sbr.rel (0) target = $region49
    $region48: #{tpu_custom_call.1} parent=1 // pred_region
      _
    $region49: #{tpu_custom_call.1} parent=1 // pred_fallthru
      _
    // Predicated region
    $region50: #{tpu_custom_call.1} parent=1 // pred_check
      _
    $region51: #{tpu_custom_call.1} parent=1 // pred_check_branch
      %104 = sbr.rel (0) target = $region53
    $region52: #{tpu_custom_call.1} parent=1 // pred_region
      _
    $region53: #{tpu_custom_call.1} parent=1 // pred_fallthru
      _
    // Predicated region
    $region54: #{tpu_custom_call.1} parent=1 // pred_check
      _
    $region55: #{tpu_custom_call.1} parent=1 // pred_check_branch
      %106 = sbr.rel (0) target = $region57
    $region56: #{tpu_custom_call.1} parent=1 // pred_region
      %107 = dma.done [#allocation3], 1024
    $region57: #{tpu_custom_call.1} parent=1 // pred_fallthru
      _
    // Predicated region
    $region58: #{tpu_custom_call.1} parent=1 // pred_check
      _
    $region59: #{tpu_custom_call.1} parent=1 // pred_check_branch
      %109 = sbr.rel (0) target = $region61
    $region60: #{tpu_custom_call.1} parent=1 // pred_region
      %110 = dma.done [#allocation6], 384
    $region61: #{tpu_custom_call.1} parent=1 // pred_fallthru
      _
    // Predicated region
    $region62: #{tpu_custom_call.1} parent=1 // pred_check
      _
    $region63: #{tpu_custom_call.1} parent=1 // pred_check_branch
      %112 = sbr.rel (0) target = $region65
    $region64: #{tpu_custom_call.1} parent=1 // pred_region
      %113 = dma.done [#allocation6], 512
    $region65: #{tpu_custom_call.1} parent=1 // pred_fallthru
      _
    // Predicated region
    $region66: #{tpu_custom_call.1} parent=1 // pred_check
      _
    $region67: #{tpu_custom_call.1} parent=1 // pred_check_branch
      %115 = sbr.rel (0) target = $region69
    $region68: #{tpu_custom_call.1} parent=1 // pred_region
      %116 = dma.done [#allocation9], 16
    $region69: #{tpu_custom_call.1} parent=1 // pred_fallthru
      _
    // Predicated region
    $region70: #{tpu_custom_call.1} parent=1 // pred_check
      _
    $region71: #{tpu_custom_call.1} parent=1 // pred_check_branch
      %118 = sbr.rel (0) target = $region73
    $region72: #{tpu_custom_call.1} parent=1 // pred_region
      %119 = dma.done [#allocation9], 512
    $region73: #{tpu_custom_call.1} parent=1 // pred_fallthru
      _
    // Predicated region
    $region74: #{tpu_custom_call.1} parent=1 // pred_check
      _
    $region75: #{tpu_custom_call.1} parent=1 // pred_check_branch
      %121 = sbr.rel (0) target = $region77
    $region76: #{tpu_custom_call.1} parent=1 // pred_region
      %122 = dma.done [#allocation12], 16
    $region77: #{tpu_custom_call.1} parent=1 // pred_fallthru
      _
    %v123 = vld [vmem:[#allocation2] sm:$0xff]
    %v124 = vld [vmem:[#allocation2 + $0x8] sm:$0xff]
    %v125 = vld [vmem:[#allocation2 + $0x10] sm:$0xff]
    %v126 = vld [vmem:[#allocation2 + $0x18] sm:$0xff]
    %v127 = vld [vmem:[#allocation2 + $0x20] sm:$0xff]
    %v128 = vld [vmem:[#allocation2 + $0x28] sm:$0xff]
    %v129 = vld [vmem:[#allocation2 + $0x30] sm:$0xff]
    %v130 = vld [vmem:[#allocation2 + $0x38] sm:$0xff]
    %vm131 = vcmask 261120
    %v132 = vsel %vm131, %v123, 0.0
    %v133 = vsel %vm131, %v124, 0.0
    %v134 = vadd.f32 %v132, %v133
    %v135 = vrot.slane %v134, 4
    %v136 = vadd.f32 %v134, %v135
    %v137 = vrot.slane %v136, 2
    %v138 = vadd.f32 %v136, %v137
    %v139 = vrot.slane %v138, 1
    %v140 = vadd.f32 %v138, %v139
    %v141 = vsel %vm131, %v125, 0.0
    %v142 = vsel %vm131, %v126, 0.0
    %v143 = vadd.f32 %v141, %v142
    %v144 = vrot.slane %v143, 4
    %v145 = vadd.f32 %v143, %v144
    %v146 = vrot.slane %v145, 2
    %v147 = vadd.f32 %v145, %v146
    %v148 = vrot.slane %v147, 1
    %v149 = vadd.f32 %v147, %v148
    %v150 = vsel %vm131, %v127, 0.0
    %v151 = vsel %vm131, %v128, 0.0
    %v152 = vadd.f32 %v150, %v151
    %v153 = vrot.slane %v152, 4
    %v154 = vadd.f32 %v152, %v153
    %v155 = vrot.slane %v154, 2
    %v156 = vadd.f32 %v154, %v155
    %v157 = vrot.slane %v156, 1
    %v158 = vadd.f32 %v156, %v157
    %v159 = vsel %vm131, %v129, 0.0
    %v160 = vsel %vm131, %v130, 0.0
    %v161 = vadd.f32 %v159, %v160
    %v162 = vrot.slane %v161, 4
    %v163 = vadd.f32 %v161, %v162
    %v164 = vrot.slane %v163, 2
    %v165 = vadd.f32 %v163, %v164
    %v166 = vrot.slane %v165, 1
    %v167 = vadd.f32 %v165, %v166
    %v168 = vrcp.pop 16.0
    %v169 = vmul.f32 %v140, %v168
    %v170 = vmul.f32 %v149, %v168
    %v171 = vmul.f32 %v158, %v168
    %v172 = vmul.f32 %v167, %v168
    %vm173 = vcmask 1040384
    %v174 = vsel %vm173, %v169, 0.0
    %v175 = vsel %vm173, %v170, 0.0
    %v176 = vsel %vm173, %v171, 0.0
    %v177 = vsel %vm173, %v172, 0.0
    %v178 = vld [vmem:[#allocation5] sm:$0xff]
    %v179 = vld [vmem:[#allocation5 + $0x8] sm:$0xff]
    %v180 = vld [vmem:[#allocation5 + $0x10] sm:$0xff]
    %v181 = vadd.f32 %v123, %v178
    %v182 = vadd.f32 %v124, %v179
    %v183 = vadd.f32 %v174, %v180
    %v184 = vadd.f32 %v125, %v178
    %v185 = vadd.f32 %v126, %v179
    %v186 = vadd.f32 %v175, %v180
    %v187 = vadd.f32 %v127, %v178
    %v188 = vadd.f32 %v128, %v179
    %v189 = vadd.f32 %v176, %v180
    %v190 = vadd.f32 %v129, %v178
    %v191 = vadd.f32 %v130, %v179
    %v192 = vadd.f32 %v177, %v180
    %v193 = vld [vmem:[%s2] sm:$0x1]
    %v194 = vadd.f32 %v169, %v193
    %v195 = vadd.f32 %v170, %v193
    %v196 = vadd.f32 %v171, %v193
    %v197 = vadd.f32 %v172, %v193
    %v198 = vld [vmem:[%s3] sm:$0xff]
    %v199 = vld [vmem:[%s3 + $0x8] sm:$0xff]
    %v200 = vld [vmem:[%s3 + $0x10] sm:$0xff]
    %v201 = vld [vmem:[%s3 + $0x18] sm:$0xff]
    %v202 = vld [vmem:[%s4] sm:$0x1]
    %v204 = vlaneseq
    %v205 = vshrl.u32 %v204, 7
    %v206 = vsub.s32 0, %v205
    %v207 = vrot.slane %v202, %v206
    %v213 = vrot.slane %v195, 7
    %vm214 = vcmask 1041409
    %v215 = vsel %vm214, %v213, %v194
    %v216 = vrot.slane %v196, 6
    %vm217 = vcmask 1042434
    %v218 = vsel %vm217, %v216, %v215
    %v219 = vrot.slane %v197, 5
    %vm220 = vcmask 1043459
    %v221 = vsel %vm220, %v219, %v218
    %v222 = vsel %vm131, %v221, 0
    %224 = vmatprep.subr.mxu0 0.0
    %225 = vmatpush1.msra.mxu0 %v198
    %226 = vmatprep.subr.mxu0 0.0
    %227 = vmatpush1.msra.mxu0 %v199
    %228 = vmatprep.subr.mxu0 0.0
    %229 = vmatpush1.msra.mxu0 %v200
    %230 = vmatprep.subr.mxu0 0.0
    %231 = vmatpush1.msra.mxu0 %v201
    %232 = vmatprep.subr.mxu0 0.0
    %233 = vmatpush1.msra.mxu0 0.0
    %234 = vmatprep.subr.mxu0 0.0
    %235 = vmatpush1.msra.mxu0 0.0
    %236 = vmatprep.subr.mxu0 0.0
    %237 = vmatpush1.msra.mxu0 0.0
    %238 = vmatprep.subr.mxu0 0.0
    %239 = vmatpush1.msra.mxu0 0.0
    %240 = vmatprep.subr.mxu0 0.0
    %241 = vmatpush1.msra.mxu0 0.0
    %242 = vmatprep.subr.mxu0 0.0
    %243 = vmatpush1.msra.mxu0 0.0
    %244 = vmatprep.subr.mxu0 0.0
    %245 = vmatpush1.msra.mxu0 0.0
    %246 = vmatprep.subr.mxu0 0.0
    %247 = vmatpush1.msra.mxu0 0.0
    %248 = vmatprep.subr.mxu0 0.0
    %249 = vmatpush1.msra.mxu0 0.0
    %250 = vmatprep.subr.mxu0 0.0
    %251 = vmatpush1.msra.mxu0 0.0
    %252 = vmatprep.subr.mxu0 0.0
    %253 = vmatpush1.msra.mxu0 0.0
    %254 = vmatprep.subr.mxu0 0.0
    %255 = vmatpush1.msra.mxu0 0.0
    %256 = vmatprep.subr.mxu0 0.0
    %257 = vmatpush1.msra.mxu0 0.0
    %258 = vmatprep.subr.mxu0 0.0
    %259 = vmatpush1.msra.mxu0 0.0
    %260 = vmatprep.subr.mxu0 0.0
    %261 = vmatpush1.msra.mxu0 0.0
    %262 = vmatprep.subr.mxu0 0.0
    %263 = vmatpush1.msra.mxu0 0.0
    %264 = vmatprep.subr.mxu0 0.0
    %265 = vmatpush1.msra.mxu0 0.0
    %266 = vmatprep.subr.mxu0 0.0
    %267 = vmatpush1.msra.mxu0 0.0
    %268 = vmatprep.subr.mxu0 0.0
    %269 = vmatpush1.msra.mxu0 0.0
    %270 = vmatprep.subr.mxu0 0.0
    %271 = vmatpush1.msra.mxu0 0.0
    %272 = vmatprep.subr.mxu0 0.0
    %273 = vmatpush1.msra.mxu0 0.0
    %274 = vmatprep.subr.mxu0 0.0
    %275 = vmatpush1.msra.mxu0 0.0
    %276 = vmatprep.subr.mxu0 0.0
    %277 = vmatpush1.msra.mxu0 0.0
    %278 = vmatprep.subr.mxu0 0.0
    %279 = vmatpush1.msra.mxu0 0.0
    %280 = vmatprep.subr.mxu0 0.0
    %281 = vmatpush1.msra.mxu0 0.0
    %282 = vmatprep.subr.mxu0 0.0
    %283 = vmatpush1.msra.mxu0 0.0
    %284 = vmatprep.subr.mxu0 0.0
    %285 = vmatpush1.msra.mxu0 0.0
    %286 = vmatprep.subr.mxu0 0.0
    %287 = vmatpush1.msra.mxu0 0.0
    %288 = vmatprep.mubr.f32.mxu0 0.0
    %289 = vmatmul.mubr.f32.gmra.mrb[0].mxu0 %v222
    %v290 = vpop.f32.mrb[0].mxu0
    %v291 = vadd.f32 %v207, %v290
    %v292 = vpop.f32.mrb[0].mxu0
    %293 = vdwg.mxu0
    %v294 = vld [vmem:[#allocation7] sm:$0xff]
    %v295 = vld [vmem:[#allocation7 + $0x8] sm:$0xff]
    %v296 = vld [vmem:[#allocation7 + $0x10] sm:$0xff]
    %v297 = vld [vmem:[#allocation7 + $0x18] sm:$0xff]
    %v298 = vld [vmem:[#allocation8] sm:$0x1]
    %v300 = vlaneseq
    %v301 = vshrl.u32 %v300, 7
    %v302 = vsub.s32 0, %v301
    %v303 = vrot.slane %v298, %v302
    %v306 = vsel %vm131, %v181, 0
    %v309 = vsel %vm131, %v182, 0
    %v312 = vsel %vm131, %v183, 0
    %v315 = vsel %vm131, %v184, 0
    %v318 = vsel %vm131, %v185, 0
    %v321 = vsel %vm131, %v186, 0
    %v324 = vsel %vm131, %v187, 0
    %v327 = vsel %vm131, %v188, 0
    %v330 = vsel %vm131, %v189, 0
    %v333 = vsel %vm131, %v190, 0
    %v336 = vsel %vm131, %v191, 0
    %v339 = vsel %vm131, %v192, 0
    %341 = vmatprep.subr.mxu0 0.0
    %342 = vmatpush1.msra.mxu0 %v294
    %343 = vmatprep.subr.mxu0 0.0
    %344 = vmatpush1.msra.mxu0 %v295
    %345 = vmatprep.subr.mxu0 0.0
    %346 = vmatpush1.msra.mxu0 %v296
    %347 = vmatprep.subr.mxu0 0.0
    %348 = vmatpush1.msra.mxu0 %v297
    %349 = vmatprep.subr.mxu0 0.0
    %350 = vmatpush1.msra.mxu0 0.0
    %351 = vmatprep.subr.mxu0 0.0
    %352 = vmatpush1.msra.mxu0 0.0
    %353 = vmatprep.subr.mxu0 0.0
    %354 = vmatpush1.msra.mxu0 0.0
    %355 = vmatprep.subr.mxu0 0.0
    %356 = vmatpush1.msra.mxu0 0.0
    %357 = vmatprep.subr.mxu0 0.0
    %358 = vmatpush1.msra.mxu0 0.0
    %359 = vmatprep.subr.mxu0 0.0
    %360 = vmatpush1.msra.mxu0 0.0
    %361 = vmatprep.subr.mxu0 0.0
    %362 = vmatpush1.msra.mxu0 0.0
    %363 = vmatprep.subr.mxu0 0.0
    %364 = vmatpush1.msra.mxu0 0.0
    %365 = vmatprep.subr.mxu0 0.0
    %366 = vmatpush1.msra.mxu0 0.0
    %367 = vmatprep.subr.mxu0 0.0
    %368 = vmatpush1.msra.mxu0 0.0
    %369 = vmatprep.subr.mxu0 0.0
    %370 = vmatpush1.msra.mxu0 0.0
    %371 = vmatprep.subr.mxu0 0.0
    %372 = vmatpush1.msra.mxu0 0.0
    %373 = vmatprep.subr.mxu0 0.0
    %374 = vmatpush1.msra.mxu0 0.0
    %375 = vmatprep.subr.mxu0 0.0
    %376 = vmatpush1.msra.mxu0 0.0
    %377 = vmatprep.subr.mxu0 0.0
    %378 = vmatpush1.msra.mxu0 0.0
    %379 = vmatprep.subr.mxu0 0.0
    %380 = vmatpush1.msra.mxu0 0.0
    %381 = vmatprep.subr.mxu0 0.0
    %382 = vmatpush1.msra.mxu0 0.0
    %383 = vmatprep.subr.mxu0 0.0
    %384 = vmatpush1.msra.mxu0 0.0
    %385 = vmatprep.subr.mxu0 0.0
    %386 = vmatpush1.msra.mxu0 0.0
    %387 = vmatprep.subr.mxu0 0.0
    %388 = vmatpush1.msra.mxu0 0.0
    %389 = vmatprep.subr.mxu0 0.0
    %390 = vmatpush1.msra.mxu0 0.0
    %391 = vmatprep.subr.mxu0 0.0
    %392 = vmatpush1.msra.mxu0 0.0
    %393 = vmatprep.subr.mxu0 0.0
    %394 = vmatpush1.msra.mxu0 0.0
    %395 = vmatprep.subr.mxu0 0.0
    %396 = vmatpush1.msra.mxu0 0.0
    %397 = vmatprep.subr.mxu0 0.0
    %398 = vmatpush1.msra.mxu0 0.0
    %399 = vmatprep.subr.mxu0 0.0
    %400 = vmatpush1.msra.mxu0 0.0
    %401 = vmatprep.subr.mxu0 0.0
    %402 = vmatpush1.msra.mxu0 0.0
    %403 = vmatprep.subr.mxu0 0.0
    %404 = vmatpush1.msra.mxu0 0.0
    %405 = vmatprep.mubr.f32.mxu0 0.0
    %406 = vmatmul.mubr.f32.gmra.mrb[0].mxu0 %v306
    %v407 = vpop.f32.mrb[0].mxu0
    %v408 = vadd.f32 %v303, %v407
    %v409 = vpop.f32.mrb[0].mxu0
    %410 = vmatprep.mubr.f32.mxu0 0.0
    %411 = vmatmul.mubr.f32.gmra.mrb[0].mxu0 %v309
    %v412 = vpop.f32.mrb[0].mxu0
    %v413 = vadd.f32 %v303, %v412
    %v414 = vpop.f32.mrb[0].mxu0
    %415 = vmatprep.mubr.f32.mxu0 0.0
    %416 = vmatmul.mubr.f32.gmra.mrb[0].mxu0 %v312
    %v417 = vpop.f32.mrb[0].mxu0
    %v418 = vadd.f32 %v303, %v417
    %v419 = vpop.f32.mrb[0].mxu0
    %420 = vmatprep.mubr.f32.mxu0 0.0
    %421 = vmatmul.mubr.f32.gmra.mrb[0].mxu0 %v315
    %v422 = vpop.f32.mrb[0].mxu0
    %v423 = vadd.f32 %v303, %v422
    %v424 = vpop.f32.mrb[0].mxu0
    %425 = vmatprep.mubr.f32.mxu0 0.0
    %426 = vmatmul.mubr.f32.gmra.mrb[0].mxu0 %v318
    %v427 = vpop.f32.mrb[0].mxu0
    %v428 = vadd.f32 %v303, %v427
    %v429 = vpop.f32.mrb[0].mxu0
    %430 = vmatprep.mubr.f32.mxu0 0.0
    %431 = vmatmul.mubr.f32.gmra.mrb[0].mxu0 %v321
    %v432 = vpop.f32.mrb[0].mxu0
    %v433 = vadd.f32 %v303, %v432
    %v434 = vpop.f32.mrb[0].mxu0
    %435 = vmatprep.mubr.f32.mxu0 0.0
    %436 = vmatmul.mubr.f32.gmra.mrb[0].mxu0 %v324
    %v437 = vpop.f32.mrb[0].mxu0
    %v438 = vadd.f32 %v303, %v437
    %v439 = vpop.f32.mrb[0].mxu0
    %440 = vmatprep.mubr.f32.mxu0 0.0
    %441 = vmatmul.mubr.f32.gmra.mrb[0].mxu0 %v327
    %v442 = vpop.f32.mrb[0].mxu0
    %v443 = vadd.f32 %v303, %v442
    %v444 = vpop.f32.mrb[0].mxu0
    %445 = vmatprep.mubr.f32.mxu0 0.0
    %446 = vmatmul.mubr.f32.gmra.mrb[0].mxu0 %v330
    %v447 = vpop.f32.mrb[0].mxu0
    %v448 = vadd.f32 %v303, %v447
    %v449 = vpop.f32.mrb[0].mxu0
    %450 = vmatprep.mubr.f32.mxu0 0.0
    %451 = vmatmul.mubr.f32.gmra.mrb[0].mxu0 %v333
    %v452 = vpop.f32.mrb[0].mxu0
    %v453 = vadd.f32 %v303, %v452
    %v454 = vpop.f32.mrb[0].mxu0
    %455 = vmatprep.mubr.f32.mxu0 0.0
    %456 = vmatmul.mubr.f32.gmra.mrb[0].mxu0 %v336
    %v457 = vpop.f32.mrb[0].mxu0
    %v458 = vadd.f32 %v303, %v457
    %v459 = vpop.f32.mrb[0].mxu0
    %460 = vmatprep.mubr.f32.mxu0 0.0
    %461 = vmatmul.mubr.f32.gmra.mrb[0].mxu0 %v339
    %v462 = vpop.f32.mrb[0].mxu0
    %v463 = vadd.f32 %v303, %v462
    %v464 = vpop.f32.mrb[0].mxu0
    %465 = vdwg.mxu0
    %v468 = vunpack.c.l.s4 1966171168
    %v469 = vunpack.c.0.s8 %v468
    %v470 = vlaneseq
    %v471 = vshrl.u32 %v470, 7
    %v472 = vsub.s32 %v469, %v471
    %v473 = vrot.slane %v291, %v472
    %v474 = vcombine.high %v473, %v473
    %v476 = vunpack.c.l.s4 1966171168
    %v477 = vunpack.c.0.s8 %v476
    %v478 = vlaneseq
    %v479 = vshrl.u32 %v478, 7
    %v480 = vsub.s32 %v477, %v479
    %v481 = vrot.slane %v473, %v480
    %v483 = vunpack.c.l.s4 1966171168
    %v484 = vunpack.c.0.s8 %v483
    %v485 = vlaneseq
    %v486 = vshrl.u32 %v485, 7
    %v487 = vsub.s32 %v484, %v486
    %v488 = vrot.slane %v474, %v487
    %v489 = vcombine.high %v481, %v481
    %v490 = vcombine.high %v488, %v488
    %v491 = vlaneseq
    %v492 = vshrl.u32 %v491, 7
    %v493 = vsub.s32 0, %v492
    %v494 = vrot.slane %v481, %v493
    %v495 = vlaneseq
    %v496 = vshrl.u32 %v495, 7
    %v497 = vsub.s32 0, %v496
    %v498 = vrot.slane %v488, %v497
    %v499 = vlaneseq
    %v500 = vshrl.u32 %v499, 7
    %v501 = vsub.s32 0, %v500
    %v502 = vrot.slane %v489, %v501
    %v503 = vlaneseq
    %v504 = vshrl.u32 %v503, 7
    %v505 = vsub.s32 0, %v504
    %v506 = vrot.slane %v490, %v505
    %v511 = vmul.f32 %v494, %v408
    %v512 = vmul.f32 %v494, %v413
    %v513 = vmul.f32 %v494, %v418
    %v514 = vmul.f32 %v498, %v423
    %v515 = vmul.f32 %v498, %v428
    %v516 = vmul.f32 %v498, %v433
    %v517 = vmul.f32 %v502, %v438
    %v518 = vmul.f32 %v502, %v443
    %v519 = vmul.f32 %v502, %v448
    %v520 = vmul.f32 %v506, %v453
    %v521 = vmul.f32 %v506, %v458
    %v522 = vmul.f32 %v506, %v463
    %v523 = vld [vmem:[%s9] sm:$0xff]
    %v524 = vld [vmem:[%s9 + $0x8] sm:$0xff]
    %v525 = vld [vmem:[%s9 + $0x10] sm:$0xff]
    %v526 = vld [vmem:[%s9 + $0x18] sm:$0xff]
    %v528 = vsel %vm131, %v511, 0
    %v531 = vsel %vm131, %v512, 0
    %v534 = vsel %vm131, %v513, 0
    %v537 = vsel %vm131, %v514, 0
    %v540 = vsel %vm131, %v515, 0
    %v543 = vsel %vm131, %v516, 0
    %v546 = vsel %vm131, %v517, 0
    %v549 = vsel %vm131, %v518, 0
    %v552 = vsel %vm131, %v519, 0
    %v555 = vsel %vm131, %v520, 0
    %v558 = vsel %vm131, %v521, 0
    %v561 = vsel %vm131, %v522, 0
    %563 = vmatprep.subr.mxu0 0.0
    %564 = vmatpush1.msra.mxu0 %v523
    %565 = vmatprep.subr.mxu0 0.0
    %566 = vmatpush1.msra.mxu0 %v524
    %567 = vmatprep.subr.mxu0 0.0
    %568 = vmatpush1.msra.mxu0 %v525
    %569 = vmatprep.subr.mxu0 0.0
    %570 = vmatpush1.msra.mxu0 %v526
    %571 = vmatprep.subr.mxu0 0.0
    %572 = vmatpush1.msra.mxu0 0.0
    %573 = vmatprep.subr.mxu0 0.0
    %574 = vmatpush1.msra.mxu0 0.0
    %575 = vmatprep.subr.mxu0 0.0
    %576 = vmatpush1.msra.mxu0 0.0
    %577 = vmatprep.subr.mxu0 0.0
    %578 = vmatpush1.msra.mxu0 0.0
    %579 = vmatprep.subr.mxu0 0.0
    %580 = vmatpush1.msra.mxu0 0.0
    %581 = vmatprep.subr.mxu0 0.0
    %582 = vmatpush1.msra.mxu0 0.0
    %583 = vmatprep.subr.mxu0 0.0
    %584 = vmatpush1.msra.mxu0 0.0
    %585 = vmatprep.subr.mxu0 0.0
    %586 = vmatpush1.msra.mxu0 0.0
    %587 = vmatprep.subr.mxu0 0.0
    %588 = vmatpush1.msra.mxu0 0.0
    %589 = vmatprep.subr.mxu0 0.0
    %590 = vmatpush1.msra.mxu0 0.0
    %591 = vmatprep.subr.mxu0 0.0
    %592 = vmatpush1.msra.mxu0 0.0
    %593 = vmatprep.subr.mxu0 0.0
    %594 = vmatpush1.msra.mxu0 0.0
    %595 = vmatprep.subr.mxu0 0.0
    %596 = vmatpush1.msra.mxu0 0.0
    %597 = vmatprep.subr.mxu0 0.0
    %598 = vmatpush1.msra.mxu0 0.0
    %599 = vmatprep.subr.mxu0 0.0
    %600 = vmatpush1.msra.mxu0 0.0
    %601 = vmatprep.subr.mxu0 0.0
    %602 = vmatpush1.msra.mxu0 0.0
    %603 = vmatprep.subr.mxu0 0.0
    %604 = vmatpush1.msra.mxu0 0.0
    %605 = vmatprep.subr.mxu0 0.0
    %606 = vmatpush1.msra.mxu0 0.0
    %607 = vmatprep.subr.mxu0 0.0
    %608 = vmatpush1.msra.mxu0 0.0
    %609 = vmatprep.subr.mxu0 0.0
    %610 = vmatpush1.msra.mxu0 0.0
    %611 = vmatprep.subr.mxu0 0.0
    %612 = vmatpush1.msra.mxu0 0.0
    %613 = vmatprep.subr.mxu0 0.0
    %614 = vmatpush1.msra.mxu0 0.0
    %615 = vmatprep.subr.mxu0 0.0
    %616 = vmatpush1.msra.mxu0 0.0
    %617 = vmatprep.subr.mxu0 0.0
    %618 = vmatpush1.msra.mxu0 0.0
    %619 = vmatprep.subr.mxu0 0.0
    %620 = vmatpush1.msra.mxu0 0.0
    %621 = vmatprep.subr.mxu0 0.0
    %622 = vmatpush1.msra.mxu0 0.0
    %623 = vmatprep.subr.mxu0 0.0
    %624 = vmatpush1.msra.mxu0 0.0
    %625 = vmatprep.subr.mxu0 0.0
    %626 = vmatpush1.msra.mxu0 0.0
    %627 = vmatprep.mubr.f32.mxu0 0.0
    %628 = vmatmul.mubr.f32.gmra.mrb[0].mxu0 %v528
    %v629 = vpop.f32.mrb[0].mxu0
    %v630 = vadd.f32 0.0, %v629
    %v631 = vpop.f32.mrb[0].mxu0
    %632 = vmatprep.mubr.f32.mxu0 0.0
    %633 = vmatmul.mubr.f32.gmra.mrb[0].mxu0 %v531
    %v634 = vpop.f32.mrb[0].mxu0
    %v635 = vadd.f32 0.0, %v634
    %v636 = vpop.f32.mrb[0].mxu0
    %637 = vmatprep.mubr.f32.mxu0 0.0
    %638 = vmatmul.mubr.f32.gmra.mrb[0].mxu0 %v534
    %v639 = vpop.f32.mrb[0].mxu0
    %v640 = vadd.f32 0.0, %v639
    %v641 = vpop.f32.mrb[0].mxu0
    %642 = vmatprep.mubr.f32.mxu0 0.0
    %643 = vmatmul.mubr.f32.gmra.mrb[0].mxu0 %v537
    %v644 = vpop.f32.mrb[0].mxu0
    %v645 = vadd.f32 0.0, %v644
    %v646 = vpop.f32.mrb[0].mxu0
    %647 = vmatprep.mubr.f32.mxu0 0.0
    %648 = vmatmul.mubr.f32.gmra.mrb[0].mxu0 %v540
    %v649 = vpop.f32.mrb[0].mxu0
    %v650 = vadd.f32 0.0, %v649
    %v651 = vpop.f32.mrb[0].mxu0
    %652 = vmatprep.mubr.f32.mxu0 0.0
    %653 = vmatmul.mubr.f32.gmra.mrb[0].mxu0 %v543
    %v654 = vpop.f32.mrb[0].mxu0
    %v655 = vadd.f32 0.0, %v654
    %v656 = vpop.f32.mrb[0].mxu0
    %657 = vmatprep.mubr.f32.mxu0 0.0
    %658 = vmatmul.mubr.f32.gmra.mrb[0].mxu0 %v546
    %v659 = vpop.f32.mrb[0].mxu0
    %v660 = vadd.f32 0.0, %v659
    %v661 = vpop.f32.mrb[0].mxu0
    %662 = vmatprep.mubr.f32.mxu0 0.0
    %663 = vmatmul.mubr.f32.gmra.mrb[0].mxu0 %v549
    %v664 = vpop.f32.mrb[0].mxu0
    %v665 = vadd.f32 0.0, %v664
    %v666 = vpop.f32.mrb[0].mxu0
    %667 = vmatprep.mubr.f32.mxu0 0.0
    %668 = vmatmul.mubr.f32.gmra.mrb[0].mxu0 %v552
    %v669 = vpop.f32.mrb[0].mxu0
    %v670 = vadd.f32 0.0, %v669
    %v671 = vpop.f32.mrb[0].mxu0
    %672 = vmatprep.mubr.f32.mxu0 0.0
    %673 = vmatmul.mubr.f32.gmra.mrb[0].mxu0 %v555
    %v674 = vpop.f32.mrb[0].mxu0
    %v675 = vadd.f32 0.0, %v674
    %v676 = vpop.f32.mrb[0].mxu0
    %677 = vmatprep.mubr.f32.mxu0 0.0
    %678 = vmatmul.mubr.f32.gmra.mrb[0].mxu0 %v558
    %v679 = vpop.f32.mrb[0].mxu0
    %v680 = vadd.f32 0.0, %v679
    %v681 = vpop.f32.mrb[0].mxu0
    %682 = vmatprep.mubr.f32.mxu0 0.0
    %683 = vmatmul.mubr.f32.gmra.mrb[0].mxu0 %v561
    %v684 = vpop.f32.mrb[0].mxu0
    %v685 = vadd.f32 0.0, %v684
    %v686 = vpop.f32.mrb[0].mxu0
    %687 = vdwg.mxu0
    %v688 = vlaneseq
    %v689 = vshrl.u32 %v688, 7
    %v690 = vadd.s32 %v689, 8
    %v691 = vadd.s32 %v689, 16
    %vm692 = vcmp.lt.s32.totalorder %v689, 17
    %vm693 = vcmp.lt.s32.totalorder %v690, 17
    %vm694 = vcmp.lt.s32.totalorder %v691, 17
    %v695 = vsel %vm692, %v630, -1e+30
    %v696 = vsel %vm693, %v635, -1e+30
    %v697 = vsel %vm694, %v640, -1e+30
    %v698 = vsel %vm692, %v645, -1e+30
    %v699 = vsel %vm693, %v650, -1e+30
    %v700 = vsel %vm694, %v655, -1e+30
    %v701 = vsel %vm692, %v660, -1e+30
    %v702 = vsel %vm693, %v665, -1e+30
    %v703 = vsel %vm694, %v670, -1e+30
    %v704 = vsel %vm692, %v675, -1e+30
    %v705 = vsel %vm693, %v680, -1e+30
    %v706 = vsel %vm694, %v685, -1e+30
    %vm707 = vcmask 31744
    %v708 = vsel %vm707, %v695, -inf
    %v709 = vsel %vm707, %v696, -inf
    %v710 = vmax.f32 %v708, %v709
    %v711 = vsel %vm707, %v697, -inf
    %v712 = vmax.f32 %v710, %v711
    %v713 = vrot.slane %v712, 4
    %v714 = vmax.f32 %v712, %v713
    %v715 = vrot.slane %v714, 2
    %v716 = vmax.f32 %v714, %v715
    %v717 = vrot.slane %v716, 1
    %v718 = vmax.f32 %v716, %v717
    %v719 = vsel %vm707, %v698, -inf
    %v720 = vsel %vm707, %v699, -inf
    %v721 = vmax.f32 %v719, %v720
    %v722 = vsel %vm707, %v700, -inf
    %v723 = vmax.f32 %v721, %v722
    %v724 = vrot.slane %v723, 4
    %v725 = vmax.f32 %v723, %v724
    %v726 = vrot.slane %v725, 2
    %v727 = vmax.f32 %v725, %v726
    %v728 = vrot.slane %v727, 1
    %v729 = vmax.f32 %v727, %v728
    %v730 = vsel %vm707, %v701, -inf
    %v731 = vsel %vm707, %v702, -inf
    %v732 = vmax.f32 %v730, %v731
    %v733 = vsel %vm707, %v703, -inf
    %v734 = vmax.f32 %v732, %v733
    %v735 = vrot.slane %v734, 4
    %v736 = vmax.f32 %v734, %v735
    %v737 = vrot.slane %v736, 2
    %v738 = vmax.f32 %v736, %v737
    %v739 = vrot.slane %v738, 1
    %v740 = vmax.f32 %v738, %v739
    %v741 = vsel %vm707, %v704, -inf
    %v742 = vsel %vm707, %v705, -inf
    %v743 = vmax.f32 %v741, %v742
    %v744 = vsel %vm707, %v706, -inf
    %v745 = vmax.f32 %v743, %v744
    %v746 = vrot.slane %v745, 4
    %v747 = vmax.f32 %v745, %v746
    %v748 = vrot.slane %v747, 2
    %v749 = vmax.f32 %v747, %v748
    %v750 = vrot.slane %v749, 1
    %v751 = vmax.f32 %v749, %v750
    %v752 = vsub.f32 %v695, %v718
    %v753 = vsub.f32 %v696, %v718
    %v754 = vsub.f32 %v697, %v718
    %v755 = vsub.f32 %v698, %v729
    %v756 = vsub.f32 %v699, %v729
    %v757 = vsub.f32 %v700, %v729
    %v758 = vsub.f32 %v701, %v740
    %v759 = vsub.f32 %v702, %v740
    %v760 = vsub.f32 %v703, %v740
    %v761 = vsub.f32 %v704, %v751
    %v762 = vsub.f32 %v705, %v751
    %v763 = vsub.f32 %v706, %v751
    %v764 = vmul.f32 %v752, 1.442695
    %v765 = vpow.pop %v764
    %v766 = vmul.f32 %v753, 1.442695
    %v767 = vpow.pop %v766
    %v768 = vmul.f32 %v754, 1.442695
    %v769 = vpow.pop %v768
    %v770 = vmul.f32 %v755, 1.442695
    %v771 = vpow.pop %v770
    %v772 = vmul.f32 %v756, 1.442695
    %v773 = vpow.pop %v772
    %v774 = vmul.f32 %v757, 1.442695
    %v775 = vpow.pop %v774
    %v776 = vmul.f32 %v758, 1.442695
    %v777 = vpow.pop %v776
    %v778 = vmul.f32 %v759, 1.442695
    %v779 = vpow.pop %v778
    %v780 = vmul.f32 %v760, 1.442695
    %v781 = vpow.pop %v780
    %v782 = vmul.f32 %v761, 1.442695
    %v783 = vpow.pop %v782
    %v784 = vmul.f32 %v762, 1.442695
    %v785 = vpow.pop %v784
    %v786 = vmul.f32 %v763, 1.442695
    %v787 = vpow.pop %v786
    %v788 = vsel %vm707, %v765, 0.0
    %v789 = vsel %vm707, %v767, 0.0
    %v790 = vadd.f32 %v788, %v789
    %v791 = vsel %vm707, %v769, 0.0
    %v792 = vadd.f32 %v790, %v791
    %v793 = vrot.slane %v792, 4
    %v794 = vadd.f32 %v792, %v793
    %v795 = vrot.slane %v794, 2
    %v796 = vadd.f32 %v794, %v795
    %v797 = vrot.slane %v796, 1
    %v798 = vadd.f32 %v796, %v797
    %v799 = vsel %vm707, %v771, 0.0
    %v800 = vsel %vm707, %v773, 0.0
    %v801 = vadd.f32 %v799, %v800
    %v802 = vsel %vm707, %v775, 0.0
    %v803 = vadd.f32 %v801, %v802
    %v804 = vrot.slane %v803, 4
    %v805 = vadd.f32 %v803, %v804
    %v806 = vrot.slane %v805, 2
    %v807 = vadd.f32 %v805, %v806
    %v808 = vrot.slane %v807, 1
    %v809 = vadd.f32 %v807, %v808
    %v810 = vsel %vm707, %v777, 0.0
    %v811 = vsel %vm707, %v779, 0.0
    %v812 = vadd.f32 %v810, %v811
    %v813 = vsel %vm707, %v781, 0.0
    %v814 = vadd.f32 %v812, %v813
    %v815 = vrot.slane %v814, 4
    %v816 = vadd.f32 %v814, %v815
    %v817 = vrot.slane %v816, 2
    %v818 = vadd.f32 %v816, %v817
    %v819 = vrot.slane %v818, 1
    %v820 = vadd.f32 %v818, %v819
    %v821 = vsel %vm707, %v783, 0.0
    %v822 = vsel %vm707, %v785, 0.0
    %v823 = vadd.f32 %v821, %v822
    %v824 = vsel %vm707, %v787, 0.0
    %v825 = vadd.f32 %v823, %v824
    %v826 = vrot.slane %v825, 4
    %v827 = vadd.f32 %v825, %v826
    %v828 = vrot.slane %v827, 2
    %v829 = vadd.f32 %v827, %v828
    %v830 = vrot.slane %v829, 1
    %v831 = vadd.f32 %v829, %v830
    %v832 = vrcp.pop %v798
    %v833 = vrcp.pop %v809
    %v834 = vrcp.pop %v820
    %v835 = vrcp.pop %v831
    %v836 = vmul.f32 %v765, %v832
    %v837 = vmul.f32 %v767, %v832
    %v838 = vmul.f32 %v769, %v832
    %v839 = vmul.f32 %v771, %v833
    %v840 = vmul.f32 %v773, %v833
    %v841 = vmul.f32 %v775, %v833
    %v842 = vmul.f32 %v777, %v834
    %v843 = vmul.f32 %v779, %v834
    %v844 = vmul.f32 %v781, %v834
    %v845 = vmul.f32 %v783, %v835
    %v846 = vmul.f32 %v785, %v835
    %v847 = vmul.f32 %v787, %v835
    %v848 = vld [vmem:[%s10] sm:$0xf]
    %v850 = vsel %vm707, %v836, 0
    %v853 = vsel %vm707, %v837, 0
    %v856 = vsel %vm707, %v838, 0
    %v859 = vsel %vm707, %v839, 0
    %v862 = vsel %vm707, %v840, 0
    %v865 = vsel %vm707, %v841, 0
    %v868 = vsel %vm707, %v842, 0
    %v871 = vsel %vm707, %v843, 0
    %v874 = vsel %vm707, %v844, 0
    %v877 = vsel %vm707, %v845, 0
    %v880 = vsel %vm707, %v846, 0
    %v883 = vsel %vm707, %v847, 0
    %vm885 = vcmask 1043456
    %v887 = vsel %vm885, %v848, 0
    %889 = vmatprep.subr.mxu0 0.0
    %890 = vmatpush1.msra.mxu0 %v887
    %891 = vmatprep.subr.mxu0 0.0
    %892 = vmatpush1.msra.mxu0 0.0
    %893 = vmatprep.subr.mxu0 0.0
    %894 = vmatpush1.msra.mxu0 0.0
    %895 = vmatprep.subr.mxu0 0.0
    %896 = vmatpush1.msra.mxu0 0.0
    %897 = vmatprep.subr.mxu0 0.0
    %898 = vmatpush1.msra.mxu0 0.0
    %899 = vmatprep.subr.mxu0 0.0
    %900 = vmatpush1.msra.mxu0 0.0
    %901 = vmatprep.subr.mxu0 0.0
    %902 = vmatpush1.msra.mxu0 0.0
    %903 = vmatprep.subr.mxu0 0.0
    %904 = vmatpush1.msra.mxu0 0.0
    %905 = vmatprep.subr.mxu0 0.0
    %906 = vmatpush1.msra.mxu0 0.0
    %907 = vmatprep.subr.mxu0 0.0
    %908 = vmatpush1.msra.mxu0 0.0
    %909 = vmatprep.subr.mxu0 0.0
    %910 = vmatpush1.msra.mxu0 0.0
    %911 = vmatprep.subr.mxu0 0.0
    %912 = vmatpush1.msra.mxu0 0.0
    %913 = vmatprep.subr.mxu0 0.0
    %914 = vmatpush1.msra.mxu0 0.0
    %915 = vmatprep.subr.mxu0 0.0
    %916 = vmatpush1.msra.mxu0 0.0
    %917 = vmatprep.subr.mxu0 0.0
    %918 = vmatpush1.msra.mxu0 0.0
    %919 = vmatprep.subr.mxu0 0.0
    %920 = vmatpush1.msra.mxu0 0.0
    %921 = vmatprep.subr.mxu0 0.0
    %922 = vmatpush1.msra.mxu0 0.0
    %923 = vmatprep.subr.mxu0 0.0
    %924 = vmatpush1.msra.mxu0 0.0
    %925 = vmatprep.subr.mxu0 0.0
    %926 = vmatpush1.msra.mxu0 0.0
    %927 = vmatprep.subr.mxu0 0.0
    %928 = vmatpush1.msra.mxu0 0.0
    %929 = vmatprep.subr.mxu0 0.0
    %930 = vmatpush1.msra.mxu0 0.0
    %931 = vmatprep.subr.mxu0 0.0
    %932 = vmatpush1.msra.mxu0 0.0
    %933 = vmatprep.subr.mxu0 0.0
    %934 = vmatpush1.msra.mxu0 0.0
    %935 = vmatprep.subr.mxu0 0.0
    %936 = vmatpush1.msra.mxu0 0.0
    %937 = vmatprep.subr.mxu0 0.0
    %938 = vmatpush1.msra.mxu0 0.0
    %939 = vmatprep.subr.mxu0 0.0
    %940 = vmatpush1.msra.mxu0 0.0
    %941 = vmatprep.subr.mxu0 0.0
    %942 = vmatpush1.msra.mxu0 0.0
    %943 = vmatprep.subr.mxu0 0.0
    %944 = vmatpush1.msra.mxu0 0.0
    %945 = vmatprep.subr.mxu0 0.0
    %946 = vmatpush1.msra.mxu0 0.0
    %947 = vmatprep.subr.mxu0 0.0
    %948 = vmatpush1.msra.mxu0 0.0
    %949 = vmatprep.subr.mxu0 0.0
    %950 = vmatpush1.msra.mxu0 0.0
    %951 = vmatprep.subr.mxu0 0.0
    %952 = vmatpush1.msra.mxu0 0.0
    %953 = vmatprep.mubr.f32.mxu0 0.0
    %954 = vmatmul.mubr.f32.gmra.mrb[0].mxu0 %v850
    %v955 = vpop.f32.mrb[0].mxu0
    %v956 = vadd.f32 0.0, %v955
    %v957 = vpop.f32.mrb[0].mxu0
    %958 = vmatprep.mubr.f32.mxu0 0.0
    %959 = vmatmul.mubr.f32.gmra.mrb[0].mxu0 %v853
    %v960 = vpop.f32.mrb[0].mxu0
    %v961 = vadd.f32 0.0, %v960
    %v962 = vpop.f32.mrb[0].mxu0
    %963 = vmatprep.mubr.f32.mxu0 0.0
    %964 = vmatmul.mubr.f32.gmra.mrb[0].mxu0 %v856
    %v965 = vpop.f32.mrb[0].mxu0
    %v966 = vadd.f32 0.0, %v965
    %v967 = vpop.f32.mrb[0].mxu0
    %968 = vmatprep.mubr.f32.mxu0 0.0
    %969 = vmatmul.mubr.f32.gmra.mrb[0].mxu0 %v859
    %v970 = vpop.f32.mrb[0].mxu0
    %v971 = vadd.f32 0.0, %v970
    %v972 = vpop.f32.mrb[0].mxu0
    %973 = vmatprep.mubr.f32.mxu0 0.0
    %974 = vmatmul.mubr.f32.gmra.mrb[0].mxu0 %v862
    %v975 = vpop.f32.mrb[0].mxu0
    %v976 = vadd.f32 0.0, %v975
    %v977 = vpop.f32.mrb[0].mxu0
    %978 = vmatprep.mubr.f32.mxu0 0.0
    %979 = vmatmul.mubr.f32.gmra.mrb[0].mxu0 %v865
    %v980 = vpop.f32.mrb[0].mxu0
    %v981 = vadd.f32 0.0, %v980
    %v982 = vpop.f32.mrb[0].mxu0
    %983 = vmatprep.mubr.f32.mxu0 0.0
    %984 = vmatmul.mubr.f32.gmra.mrb[0].mxu0 %v868
    %v985 = vpop.f32.mrb[0].mxu0
    %v986 = vadd.f32 0.0, %v985
    %v987 = vpop.f32.mrb[0].mxu0
    %988 = vmatprep.mubr.f32.mxu0 0.0
    %989 = vmatmul.mubr.f32.gmra.mrb[0].mxu0 %v871
    %v990 = vpop.f32.mrb[0].mxu0
    %v991 = vadd.f32 0.0, %v990
    %v992 = vpop.f32.mrb[0].mxu0
    %993 = vmatprep.mubr.f32.mxu0 0.0
    %994 = vmatmul.mubr.f32.gmra.mrb[0].mxu0 %v874
    %v995 = vpop.f32.mrb[0].mxu0
    %v996 = vadd.f32 0.0, %v995
    %v997 = vpop.f32.mrb[0].mxu0
    %998 = vmatprep.mubr.f32.mxu0 0.0
    %999 = vmatmul.mubr.f32.gmra.mrb[0].mxu0 %v877
    %v1000 = vpop.f32.mrb[0].mxu0
    %v1001 = vadd.f32 0.0, %v1000
    %v1002 = vpop.f32.mrb[0].mxu0
    %1003 = vmatprep.mubr.f32.mxu0 0.0
    %1004 = vmatmul.mubr.f32.gmra.mrb[0].mxu0 %v880
    %v1005 = vpop.f32.mrb[0].mxu0
    %v1006 = vadd.f32 0.0, %v1005
    %v1007 = vpop.f32.mrb[0].mxu0
    %1008 = vmatprep.mubr.f32.mxu0 0.0
    %1009 = vmatmul.mubr.f32.gmra.mrb[0].mxu0 %v883
    %v1010 = vpop.f32.mrb[0].mxu0
    %v1011 = vadd.f32 0.0, %v1010
    %v1012 = vpop.f32.mrb[0].mxu0
    %1013 = vdwg.mxu0
    %v1014 = vld [vmem:[#allocation10] sm:$0xff]
    %v1015 = vld [vmem:[#allocation10 + $0x8] sm:$0xff]
    %v1016 = vld [vmem:[#allocation10 + $0x10] sm:$0xff]
    %v1017 = vld [vmem:[#allocation10 + $0x18] sm:$0xff]
    %v1018 = vld [vmem:[#allocation11] sm:$0x1]
    %v1020 = vlaneseq
    %v1021 = vshrl.u32 %v1020, 7
    %v1022 = vsub.s32 0, %v1021
    %v1023 = vrot.slane %v1018, %v1022
    %1025 = vmatprep.subr.mxu0 0.0
    %1026 = vmatpush1.msra.mxu0 %v1014
    %1027 = vmatprep.subr.mxu0 0.0
    %1028 = vmatpush1.msra.mxu0 %v1015
    %1029 = vmatprep.subr.mxu0 0.0
    %1030 = vmatpush1.msra.mxu0 %v1016
    %1031 = vmatprep.subr.mxu0 0.0
    %1032 = vmatpush1.msra.mxu0 %v1017
    %1033 = vmatprep.subr.mxu0 0.0
    %1034 = vmatpush1.msra.mxu0 0.0
    %1035 = vmatprep.subr.mxu0 0.0
    %1036 = vmatpush1.msra.mxu0 0.0
    %1037 = vmatprep.subr.mxu0 0.0
    %1038 = vmatpush1.msra.mxu0 0.0
    %1039 = vmatprep.subr.mxu0 0.0
    %1040 = vmatpush1.msra.mxu0 0.0
    %1041 = vmatprep.subr.mxu0 0.0
    %1042 = vmatpush1.msra.mxu0 0.0
    %1043 = vmatprep.subr.mxu0 0.0
    %1044 = vmatpush1.msra.mxu0 0.0
    %1045 = vmatprep.subr.mxu0 0.0
    %1046 = vmatpush1.msra.mxu0 0.0
    %1047 = vmatprep.subr.mxu0 0.0
    %1048 = vmatpush1.msra.mxu0 0.0
    %1049 = vmatprep.subr.mxu0 0.0
    %1050 = vmatpush1.msra.mxu0 0.0
    %1051 = vmatprep.subr.mxu0 0.0
    %1052 = vmatpush1.msra.mxu0 0.0
    %1053 = vmatprep.subr.mxu0 0.0
    %1054 = vmatpush1.msra.mxu0 0.0
    %1055 = vmatprep.subr.mxu0 0.0
    %1056 = vmatpush1.msra.mxu0 0.0
    %1057 = vmatprep.subr.mxu0 0.0
    %1058 = vmatpush1.msra.mxu0 0.0
    %1059 = vmatprep.subr.mxu0 0.0
    %1060 = vmatpush1.msra.mxu0 0.0
    %1061 = vmatprep.subr.mxu0 0.0
    %1062 = vmatpush1.msra.mxu0 0.0
    %1063 = vmatprep.subr.mxu0 0.0
    %1064 = vmatpush1.msra.mxu0 0.0
    %1065 = vmatprep.subr.mxu0 0.0
    %1066 = vmatpush1.msra.mxu0 0.0
    %1067 = vmatprep.subr.mxu0 0.0
    %1068 = vmatpush1.msra.mxu0 0.0
    %1069 = vmatprep.subr.mxu0 0.0
    %1070 = vmatpush1.msra.mxu0 0.0
    %1071 = vmatprep.subr.mxu0 0.0
    %1072 = vmatpush1.msra.mxu0 0.0
    %1073 = vmatprep.subr.mxu0 0.0
    %1074 = vmatpush1.msra.mxu0 0.0
    %1075 = vmatprep.subr.mxu0 0.0
    %1076 = vmatpush1.msra.mxu0 0.0
    %1077 = vmatprep.subr.mxu0 0.0
    %1078 = vmatpush1.msra.mxu0 0.0
    %1079 = vmatprep.subr.mxu0 0.0
    %1080 = vmatpush1.msra.mxu0 0.0
    %1081 = vmatprep.subr.mxu0 0.0
    %1082 = vmatpush1.msra.mxu0 0.0
    %1083 = vmatprep.subr.mxu0 0.0
    %1084 = vmatpush1.msra.mxu0 0.0
    %1085 = vmatprep.subr.mxu0 0.0
    %1086 = vmatpush1.msra.mxu0 0.0
    %1087 = vmatprep.subr.mxu0 0.0
    %1088 = vmatpush1.msra.mxu0 0.0
    %1089 = vmatprep.mubr.f32.mxu0 0.0
    %1090 = vmatmul.mubr.f32.gmra.mrb[0].mxu0 %v306
    %v1091 = vpop.f32.mrb[0].mxu0
    %v1092 = vadd.f32 %v1023, %v1091
    %v1093 = vpop.f32.mrb[0].mxu0
    %1094 = vmatprep.mubr.f32.mxu0 0.0
    %1095 = vmatmul.mubr.f32.gmra.mrb[0].mxu0 %v309
    %v1096 = vpop.f32.mrb[0].mxu0
    %v1097 = vadd.f32 %v1023, %v1096
    %v1098 = vpop.f32.mrb[0].mxu0
    %1099 = vmatprep.mubr.f32.mxu0 0.0
    %1100 = vmatmul.mubr.f32.gmra.mrb[0].mxu0 %v312
    %v1101 = vpop.f32.mrb[0].mxu0
    %v1102 = vadd.f32 %v1023, %v1101
    %v1103 = vpop.f32.mrb[0].mxu0
    %1104 = vmatprep.mubr.f32.mxu0 0.0
    %1105 = vmatmul.mubr.f32.gmra.mrb[0].mxu0 %v315
    %v1106 = vpop.f32.mrb[0].mxu0
    %v1107 = vadd.f32 %v1023, %v1106
    %v1108 = vpop.f32.mrb[0].mxu0
    %1109 = vmatprep.mubr.f32.mxu0 0.0
    %1110 = vmatmul.mubr.f32.gmra.mrb[0].mxu0 %v318
    %v1111 = vpop.f32.mrb[0].mxu0
    %v1112 = vadd.f32 %v1023, %v1111
    %v1113 = vpop.f32.mrb[0].mxu0
    %1114 = vmatprep.mubr.f32.mxu0 0.0
    %1115 = vmatmul.mubr.f32.gmra.mrb[0].mxu0 %v321
    %v1116 = vpop.f32.mrb[0].mxu0
    %v1117 = vadd.f32 %v1023, %v1116
    %v1118 = vpop.f32.mrb[0].mxu0
    %1119 = vmatprep.mubr.f32.mxu0 0.0
    %1120 = vmatmul.mubr.f32.gmra.mrb[0].mxu0 %v324
    %v1121 = vpop.f32.mrb[0].mxu0
    %v1122 = vadd.f32 %v1023, %v1121
    %v1123 = vpop.f32.mrb[0].mxu0
    %1124 = vmatprep.mubr.f32.mxu0 0.0
    %1125 = vmatmul.mubr.f32.gmra.mrb[0].mxu0 %v327
    %v1126 = vpop.f32.mrb[0].mxu0
    %v1127 = vadd.f32 %v1023, %v1126
    %v1128 = vpop.f32.mrb[0].mxu0
    %1129 = vmatprep.mubr.f32.mxu0 0.0
    %1130 = vmatmul.mubr.f32.gmra.mrb[0].mxu0 %v330
    %v1131 = vpop.f32.mrb[0].mxu0
    %v1132 = vadd.f32 %v1023, %v1131
    %v1133 = vpop.f32.mrb[0].mxu0
    %1134 = vmatprep.mubr.f32.mxu0 0.0
    %1135 = vmatmul.mubr.f32.gmra.mrb[0].mxu0 %v333
    %v1136 = vpop.f32.mrb[0].mxu0
    %v1137 = vadd.f32 %v1023, %v1136
    %v1138 = vpop.f32.mrb[0].mxu0
    %1139 = vmatprep.mubr.f32.mxu0 0.0
    %1140 = vmatmul.mubr.f32.gmra.mrb[0].mxu0 %v336
    %v1141 = vpop.f32.mrb[0].mxu0
    %v1142 = vadd.f32 %v1023, %v1141
    %v1143 = vpop.f32.mrb[0].mxu0
    %1144 = vmatprep.mubr.f32.mxu0 0.0
    %1145 = vmatmul.mubr.f32.gmra.mrb[0].mxu0 %v339
    %v1146 = vpop.f32.mrb[0].mxu0
    %v1147 = vadd.f32 %v1023, %v1146
    %v1148 = vpop.f32.mrb[0].mxu0
    %1149 = vdwg.mxu0
    %v1150 = vmul.f32 %v956, %v1092
    %v1151 = vmul.f32 %v961, %v1097
    %v1152 = vmul.f32 %v966, %v1102
    %v1153 = vmul.f32 %v971, %v1107
    %v1154 = vmul.f32 %v976, %v1112
    %v1155 = vmul.f32 %v981, %v1117
    %v1156 = vmul.f32 %v986, %v1122
    %v1157 = vmul.f32 %v991, %v1127
    %v1158 = vmul.f32 %v996, %v1132
    %v1159 = vmul.f32 %v1001, %v1137
    %v1160 = vmul.f32 %v1006, %v1142
    %v1161 = vmul.f32 %v1011, %v1147
    %v1162 = vsel %vm131, %v1150, 0.0
    %v1163 = vsel %vm131, %v1151, 0.0
    %v1164 = vadd.f32 %v1162, %v1163
    %v1165 = vsel %vm131, %v1152, 0.0
    %v1166 = vadd.f32 %v1164, %v1165
    %v1167 = vrot.slane %v1166, 4
    %v1168 = vadd.f32 %v1166, %v1167
    %v1169 = vrot.slane %v1168, 2
    %v1170 = vadd.f32 %v1168, %v1169
    %v1171 = vrot.slane %v1170, 1
    %v1172 = vadd.f32 %v1170, %v1171
    %v1173 = vsel %vm131, %v1153, 0.0
    %v1174 = vsel %vm131, %v1154, 0.0
    %v1175 = vadd.f32 %v1173, %v1174
    %v1176 = vsel %vm131, %v1155, 0.0
    %v1177 = vadd.f32 %v1175, %v1176
    %v1178 = vrot.slane %v1177, 4
    %v1179 = vadd.f32 %v1177, %v1178
    %v1180 = vrot.slane %v1179, 2
    %v1181 = vadd.f32 %v1179, %v1180
    %v1182 = vrot.slane %v1181, 1
    %v1183 = vadd.f32 %v1181, %v1182
    %v1184 = vsel %vm131, %v1156, 0.0
    %v1185 = vsel %vm131, %v1157, 0.0
    %v1186 = vadd.f32 %v1184, %v1185
    %v1187 = vsel %vm131, %v1158, 0.0
    %v1188 = vadd.f32 %v1186, %v1187
    %v1189 = vrot.slane %v1188, 4
    %v1190 = vadd.f32 %v1188, %v1189
    %v1191 = vrot.slane %v1190, 2
    %v1192 = vadd.f32 %v1190, %v1191
    %v1193 = vrot.slane %v1192, 1
    %v1194 = vadd.f32 %v1192, %v1193
    %v1195 = vsel %vm131, %v1159, 0.0
    %v1196 = vsel %vm131, %v1160, 0.0
    %v1197 = vadd.f32 %v1195, %v1196
    %v1198 = vsel %vm131, %v1161, 0.0
    %v1199 = vadd.f32 %v1197, %v1198
    %v1200 = vrot.slane %v1199, 4
    %v1201 = vadd.f32 %v1199, %v1200
    %v1202 = vrot.slane %v1201, 2
    %v1203 = vadd.f32 %v1201, %v1202
    %v1204 = vrot.slane %v1203, 1
    %v1205 = vadd.f32 %v1203, %v1204
    %v1206 = vld [vmem:[%s11] sm:$0xff]
    %v1207 = vld [vmem:[%s11 + $0x8] sm:$0xff]
    %v1208 = vld [vmem:[%s11 + $0x10] sm:$0xff]
    %v1209 = vld [vmem:[%s11 + $0x18] sm:$0xff]
    %v1210 = vld [vmem:[%s12] sm:$0x1]
    %v1212 = vlaneseq
    %v1213 = vshrl.u32 %v1212, 7
    %v1214 = vsub.s32 0, %v1213
    %v1215 = vrot.slane %v1210, %v1214
    %v1221 = vsel %vm214, %v1183, %v1172
    %v1222 = vsel %vm217, %v1194, %v1221
    %v1223 = vsel %vm220, %v1205, %v1222
    %v1224 = vsel %vm131, %v1223, 0
    %1226 = vmatprep.subr.mxu0 0.0
    %1227 = vmatpush1.msra.mxu0 %v1206
    %1228 = vmatprep.subr.mxu0 0.0
    %1229 = vmatpush1.msra.mxu0 %v1207
    %1230 = vmatprep.subr.mxu0 0.0
    %1231 = vmatpush1.msra.mxu0 %v1208
    %1232 = vmatprep.subr.mxu0 0.0
    %1233 = vmatpush1.msra.mxu0 %v1209
    %1234 = vmatprep.subr.mxu0 0.0
    %1235 = vmatpush1.msra.mxu0 0.0
    %1236 = vmatprep.subr.mxu0 0.0
    %1237 = vmatpush1.msra.mxu0 0.0
    %1238 = vmatprep.subr.mxu0 0.0
    %1239 = vmatpush1.msra.mxu0 0.0
    %1240 = vmatprep.subr.mxu0 0.0
    %1241 = vmatpush1.msra.mxu0 0.0
    %1242 = vmatprep.subr.mxu0 0.0
    %1243 = vmatpush1.msra.mxu0 0.0
    %1244 = vmatprep.subr.mxu0 0.0
    %1245 = vmatpush1.msra.mxu0 0.0
    %1246 = vmatprep.subr.mxu0 0.0
    %1247 = vmatpush1.msra.mxu0 0.0
    %1248 = vmatprep.subr.mxu0 0.0
    %1249 = vmatpush1.msra.mxu0 0.0
    %1250 = vmatprep.subr.mxu0 0.0
    %1251 = vmatpush1.msra.mxu0 0.0
    %1252 = vmatprep.subr.mxu0 0.0
    %1253 = vmatpush1.msra.mxu0 0.0
    %1254 = vmatprep.subr.mxu0 0.0
    %1255 = vmatpush1.msra.mxu0 0.0
    %1256 = vmatprep.subr.mxu0 0.0
    %1257 = vmatpush1.msra.mxu0 0.0
    %1258 = vmatprep.subr.mxu0 0.0
    %1259 = vmatpush1.msra.mxu0 0.0
    %1260 = vmatprep.subr.mxu0 0.0
    %1261 = vmatpush1.msra.mxu0 0.0
    %1262 = vmatprep.subr.mxu0 0.0
    %1263 = vmatpush1.msra.mxu0 0.0
    %1264 = vmatprep.subr.mxu0 0.0
    %1265 = vmatpush1.msra.mxu0 0.0
    %1266 = vmatprep.subr.mxu0 0.0
    %1267 = vmatpush1.msra.mxu0 0.0
    %1268 = vmatprep.subr.mxu0 0.0
    %1269 = vmatpush1.msra.mxu0 0.0
    %1270 = vmatprep.subr.mxu0 0.0
    %1271 = vmatpush1.msra.mxu0 0.0
    %1272 = vmatprep.subr.mxu0 0.0
    %1273 = vmatpush1.msra.mxu0 0.0
    %1274 = vmatprep.subr.mxu0 0.0
    %1275 = vmatpush1.msra.mxu0 0.0
    %1276 = vmatprep.subr.mxu0 0.0
    %1277 = vmatpush1.msra.mxu0 0.0
    %1278 = vmatprep.subr.mxu0 0.0
    %1279 = vmatpush1.msra.mxu0 0.0
    %1280 = vmatprep.subr.mxu0 0.0
    %1281 = vmatpush1.msra.mxu0 0.0
    %1282 = vmatprep.subr.mxu0 0.0
    %1283 = vmatpush1.msra.mxu0 0.0
    %1284 = vmatprep.subr.mxu0 0.0
    %1285 = vmatpush1.msra.mxu0 0.0
    %1286 = vmatprep.subr.mxu0 0.0
    %1287 = vmatpush1.msra.mxu0 0.0
    %1288 = vmatprep.subr.mxu0 0.0
    %1289 = vmatpush1.msra.mxu0 0.0
    %1290 = vmatprep.mubr.f32.mxu0 0.0
    %1291 = vmatmul.mubr.f32.gmra.mrb[0].mxu0 %v1224
    %v1292 = vpop.f32.mrb[0].mxu0
    %v1293 = vadd.f32 %v1215, %v1292
    %v1294 = vpop.f32.mrb[0].mxu0
    %1295 = vdwg.mxu0
    %1296 = vst [vmem:[#allocation13] sm:$0xf] %v1293
    // Predicated region
    $region78: #{tpu_custom_call.1} parent=1 // pred_check
      _
    $region79: #{tpu_custom_call.1} parent=1 // pred_check_branch
      %1298 = sbr.rel (0) target = $region81
    $region80: #{tpu_custom_call.1} parent=1 // pred_region
      %s1300 = ssub.s32 64, 64
      %1301 = vsyncadd [#allocation4], %s1300
      %s1303 = sshll.u32 [#allocation13], 4
      %s1304 = int_to_ptr.vmem [resolvable:$true] %s1303
      %1306 = dma.vmem_to_hbm [thread:$0]  %s1304, 64, %s13, [#allocation4]
    $region81: #{tpu_custom_call.1} parent=1 // pred_fallthru
      _
    // Predicated region
    $region82: #{tpu_custom_call.1} parent=1 // pred_check
      _
    $region83: #{tpu_custom_call.1} parent=1 // pred_check_branch
      %1308 = sbr.rel (0) target = $region85
    $region84: #{tpu_custom_call.1} parent=1 // pred_region
      %1309 = dma.done [#allocation4], 64
    $region85: #{tpu_custom_call.1} parent=1 // pred_fallthru
      _
    %1310 = vsyncpa [#allocation3], 1
    %1311 = vsyncpa [#allocation6], 1
    %1312 = vsyncpa [#allocation9], 1
    %1313 = vsyncpa [#allocation12], 1
    %1314 = vsyncpa [#allocation4], 1

</llo_original>
